<compile_context>
chip_gen: v7x
topology: tpu7x:2x2x1
jax: 0.10.0
libtpu: 0.0.40
codegen_flags: <defaults>
</compile_context>

<pallas_src>
import functools

import jax
import jax.numpy as jnp
from jax.experimental import pallas as pl
from jax.experimental.pallas import tpu as pltpu

LAYER_DRUG = 3
DIM_DRUG = 128
IN_DIM = 77
PAD_IN = 128          # 77 zero-padded to 128 for lane-friendly layout (exact)
BN_EPS = 1e-5


def gnn_drug_kernel(x_ref, adj_ref, mask2_ref, mask3_ref,
                    w1_ref, b1_ref, w2_ref, b2_ref,
                    gamma_ref, beta_ref, out_ref, rep_ref, *, inv_n):
    G, P, _ = x_ref.shape
    GP = G * P

    adj = adj_ref[...]                  # (G, P, P)  block adjacency, self-loops folded in
    mask2 = mask2_ref[...]              # (GP, 1)    1.0 for real nodes, 0.0 for padding
    h = x_ref[...].reshape(GP, -1)      # (GP, 128)

    for i in range(LAYER_DRUG):
        # GIN aggregation (eps = 0, self term folded into adj): per-graph block matmul.
        agg = jnp.einsum('gij,gjf->gif', adj, h.reshape(G, P, -1),
                         preferred_element_type=jnp.float32).reshape(GP, -1)
        # MLP block: Linear -> ReLU -> Linear (flat (GP, F) matmuls on the MXU).
        h1 = jnp.maximum(
            jnp.dot(agg, w1_ref[i], preferred_element_type=jnp.float32) + b1_ref[i], 0.0)
        h2 = jnp.dot(h1, w2_ref[i], preferred_element_type=jnp.float32) + b2_ref[i]
        # outer ReLU from forward()
        h = jnp.maximum(h2, 0.0)
        # BatchNorm1d over real nodes only (masked, centered variance — exact under padding).
        mean = jnp.sum(h * mask2, axis=0, keepdims=True) * inv_n
        cent = (h - mean) * mask2
        var = jnp.sum(cent * cent, axis=0, keepdims=True) * inv_n
        h = gamma_ref[i] * (h - mean) * jax.lax.rsqrt(var + BN_EPS) + beta_ref[i]
        # JumpingKnowledge('cat'): write straight into the 384-wide scratch slab (128-aligned).
        rep_ref[:, i * DIM_DRUG:(i + 1) * DIM_DRUG] = h

    # global_max_pool: one masked reduce over the node axis of each graph block.
    rep3 = rep_ref[...].reshape(G, P, LAYER_DRUG * DIM_DRUG)
    masked = jnp.where(mask3_ref[...] > 0.5, rep3, jnp.float32(-jnp.inf))
    out_ref[...] = jnp.max(masked, axis=1)


def gnn_drug_forward(x_blocks, adj_blocks, mask2, mask3, params, num_valid_nodes):
    G, P, _ = x_blocks.shape
    vmem = pl.BlockSpec(memory_space=pltpu.MemorySpace.VMEM)
    kernel = functools.partial(gnn_drug_kernel, inv_n=1.0 / float(num_valid_nodes))
    return pl.pallas_call(
        kernel,
        out_shape=jax.ShapeDtypeStruct((G, LAYER_DRUG * DIM_DRUG), jnp.float32),
        in_specs=[vmem] * 10,
        out_specs=vmem,
        scratch_shapes=[pltpu.VMEM((G * P, LAYER_DRUG * DIM_DRUG), jnp.float32)],
    )(x_blocks, adj_blocks, mask2, mask3,
      params["w1"], params["b1"], params["w2"], params["b2"],
      params["gamma"], params["beta"])


def init_params(key):
    """Deterministic synthetic parameters with the shapes implied by __init__."""
    ks = jax.random.split(key, 6 * LAYER_DRUG)
    w1, b1, w2, b2, gamma, beta = [], [], [], [], [], []
    for i in range(LAYER_DRUG):
        in_dim = IN_DIM if i == 0 else DIM_DRUG
        k0, k1, k2, k3, k4, k5 = ks[6 * i:6 * i + 6]
        w1_i = 0.05 * jax.random.normal(k0, (in_dim, DIM_DRUG), jnp.float32)
        if in_dim < PAD_IN:  # zero-pad rows so padded input features are a no-op (exact)
            w1_i = jnp.concatenate(
                [w1_i, jnp.zeros((PAD_IN - in_dim, DIM_DRUG), jnp.float32)], axis=0)
        w1.append(w1_i)
        b1.append(0.05 * jax.random.normal(k1, (1, DIM_DRUG), jnp.float32))
        w2.append(0.05 * jax.random.normal(k2, (DIM_DRUG, DIM_DRUG), jnp.float32))
        b2.append(0.05 * jax.random.normal(k3, (1, DIM_DRUG), jnp.float32))
        gamma.append(1.0 + 0.1 * jax.random.normal(k4, (1, DIM_DRUG), jnp.float32))
        beta.append(0.1 * jax.random.normal(k5, (1, DIM_DRUG), jnp.float32))
    return {
        "w1": jnp.stack(w1), "b1": jnp.stack(b1),
        "w2": jnp.stack(w2), "b2": jnp.stack(b2),
        "gamma": jnp.stack(gamma), "beta": jnp.stack(beta),
    }


def reference(x_pad, adj_flat, batch, num_graphs, params):
    """Pure-JAX reference of the original (flat, unpadded-node) semantics."""
    h = x_pad
    outs = []
    for i in range(LAYER_DRUG):
        agg = h + adj_flat @ h
        h1 = jnp.maximum(agg @ params["w1"][i] + params["b1"][i], 0.0)
        h = jnp.maximum(h1 @ params["w2"][i] + params["b2"][i], 0.0)
        mean = h.mean(axis=0, keepdims=True)
        var = ((h - mean) ** 2).mean(axis=0, keepdims=True)
        h = params["gamma"][i] * (h - mean) / jnp.sqrt(var + BN_EPS) + params["beta"][i]
        outs.append(h)
    rep = jnp.concatenate(outs, axis=-1)
    in_graph = batch[None, :] == jnp.arange(num_graphs, dtype=jnp.int32)[:, None]
    return jnp.where(in_graph[:, :, None], rep[None], -jnp.inf).max(axis=1)


if __name__ == "__main__":
    key = jax.random.PRNGKey(0)
    k_x, k_p = jax.random.split(key)

    # Small synthetic "drug" graph batch: 4 graphs with varying node counts, padded to P=16.
    node_counts = (12, 16, 10, 16)
    G = len(node_counts)
    P = 16                               # per-graph node padding (multiple of 8)
    N = sum(node_counts)

    offsets, acc = [], 0
    for c in node_counts:
        offsets.append(acc)
        acc += c
    offsets_arr = jnp.array(offsets, jnp.int32)
    batch = jnp.concatenate(
        [jnp.full((c,), g, jnp.int32) for g, c in enumerate(node_counts)])
    local = jnp.arange(N, dtype=jnp.int32) - offsets_arr[batch]

    # edge_index: within each graph, a bidirectional ring plus a bidirectional chord (+3).
    src_list, dst_list = [], []
    for g, n_g in enumerate(node_counts):
        off = offsets[g]
        for i in range(n_g):
            for d in (1, 3):
                a, b = off + i, off + ((i + d) % n_g)
                src_list += [a, b]
                dst_list += [b, a]
    src = jnp.array(src_list, jnp.int32)
    dst = jnp.array(dst_list, jnp.int32)

    # Node features (N, 77), zero-padded to 128 lanes (exact: matching W1[0] rows are zero).
    x = jax.random.normal(k_x, (N, IN_DIM), jnp.float32)
    x_pad = jnp.concatenate([x, jnp.zeros((N, PAD_IN - IN_DIM), jnp.float32)], axis=1)

    # Block-diagonal glue for the kernel: per-graph blocks padded to P nodes.
    x_blocks = jnp.zeros((G, P, PAD_IN), jnp.float32).at[batch, local].set(x_pad)
    adj_blocks = jnp.zeros((G, P, P), jnp.float32).at[
        batch[dst], local[dst], local[src]].add(1.0)
    adj_blocks = adj_blocks.at[batch, local, local].add(1.0)   # fold GIN self term (eps = 0)
    mask2 = jnp.zeros((G * P, 1), jnp.float32).at[batch * P + local, 0].set(1.0)
    mask3 = mask2.reshape(G, P, 1)

    params = init_params(k_p)

    out = gnn_drug_forward(x_blocks, adj_blocks, mask2, mask3, params, N)
    out = jax.block_until_ready(out)

    # Correctness check against the flat-graph reference.
    adj_flat = jnp.zeros((N, N), jnp.float32).at[dst, src].add(1.0)
    ref = reference(x_pad, adj_flat, batch, G, params)

    assert out.shape == (G, LAYER_DRUG * DIM_DRUG)
    assert jnp.allclose(out, ref, rtol=1e-4, atol=1e-4), "mismatch vs reference"

    print("KERNEL_OK")
</pallas_src>

<mosaic_0001>
module attributes {stable_mosaic.version = 11 : i64} {
  func.func @gnn_drug_kernel(%arg0: memref<4x16x128xf32, #tpu.memory_space<vmem>>, %arg1: memref<4x16x16xf32, #tpu.memory_space<vmem>>, %arg2: memref<64x1xf32, #tpu.memory_space<vmem>>, %arg3: memref<4x16x1xf32, #tpu.memory_space<vmem>>, %arg4: memref<3x128x128xf32, #tpu.memory_space<vmem>>, %arg5: memref<3x1x128xf32, #tpu.memory_space<vmem>>, %arg6: memref<3x128x128xf32, #tpu.memory_space<vmem>>, %arg7: memref<3x1x128xf32, #tpu.memory_space<vmem>>, %arg8: memref<3x1x128xf32, #tpu.memory_space<vmem>>, %arg9: memref<3x1x128xf32, #tpu.memory_space<vmem>>, %arg10: memref<4x384xf32, #tpu.memory_space<vmem>>, %arg11: memref<64x384xf32, #tpu.memory_space<vmem>>) attributes {dimension_semantics = [], scalar_prefetch = 0 : i64, scratch_operands = 1 : i64, tpu.core_type = #tpu.core_type<tc>} {
    %c0 = arith.constant 0 : index
    %c0_0 = arith.constant 0 : index
    %c0_1 = arith.constant 0 : index
    %0 = vector.load %arg1[%c0, %c0_0, %c0_1] : memref<4x16x16xf32, #tpu.memory_space<vmem>>, vector<4x16x16xf32>
    %c0_2 = arith.constant 0 : index
    %c0_3 = arith.constant 0 : index
    %1 = vector.load %arg2[%c0_2, %c0_3] : memref<64x1xf32, #tpu.memory_space<vmem>>, vector<64x1xf32>
    %c0_4 = arith.constant 0 : index
    %c0_5 = arith.constant 0 : index
    %c0_6 = arith.constant 0 : index
    %2 = vector.load %arg0[%c0_4, %c0_5, %c0_6] : memref<4x16x128xf32, #tpu.memory_space<vmem>>, vector<4x16x128xf32>
    %3 = vector.shape_cast %2 : vector<4x16x128xf32> to vector<64x128xf32>
    %4 = vector.shape_cast %3 : vector<64x128xf32> to vector<4x16x128xf32>
    "tpu.trace_start"() <{level = 10 : i32, message = "gij,gjf->gif"}> : () -> ()
    %cst = arith.constant dense<0.000000e+00> : vector<4x16x128xf32>
    %5 = tpu.matmul %0, %4, %cst {dimension_numbers = #tpu.dot_dimension_numbers<[2], [1], [1], [2], [0, 0, 0, 1, 1, 2], [0], [0]>} : vector<4x16x16xf32>, vector<4x16x128xf32>, vector<4x16x128xf32> -> vector<4x16x128xf32>
    "tpu.trace_stop"() : () -> ()
    %6 = vector.shape_cast %5 : vector<4x16x128xf32> to vector<64x128xf32>
    %c0_7 = arith.constant 0 : index
    %c0_8 = arith.constant 0 : index
    %c0_9 = arith.constant 0 : index
    %7 = vector.load %arg4[%c0_7, %c0_8, %c0_9] : memref<3x128x128xf32, #tpu.memory_space<vmem>>, vector<1x128x128xf32>
    %8 = vector.shape_cast %7 : vector<1x128x128xf32> to vector<128x128xf32>
    %cst_10 = arith.constant dense<0.000000e+00> : vector<64x128xf32>
    %9 = tpu.matmul %6, %8, %cst_10 {dimension_numbers = #tpu.dot_dimension_numbers<[1], [0], [0], [1], [0, 0, 1, 1], [], []>} : vector<64x128xf32>, vector<128x128xf32>, vector<64x128xf32> -> vector<64x128xf32>
    %c0_11 = arith.constant 0 : index
    %c0_12 = arith.constant 0 : index
    %c0_13 = arith.constant 0 : index
    %10 = vector.load %arg5[%c0_11, %c0_12, %c0_13] : memref<3x1x128xf32, #tpu.memory_space<vmem>>, vector<1x1x128xf32>
    %11 = vector.shape_cast %10 : vector<1x1x128xf32> to vector<1x128xf32>
    %12 = vector.broadcast %11 : vector<1x128xf32> to vector<64x128xf32>
    %13 = arith.addf %9, %12 : vector<64x128xf32>
    %cst_14 = arith.constant 0.000000e+00 : f32
    %14 = vector.broadcast %cst_14 : f32 to vector<64x128xf32>
    %15 = arith.maximumf %13, %14 : vector<64x128xf32>
    %c0_15 = arith.constant 0 : index
    %c0_16 = arith.constant 0 : index
    %c0_17 = arith.constant 0 : index
    %16 = vector.load %arg6[%c0_15, %c0_16, %c0_17] : memref<3x128x128xf32, #tpu.memory_space<vmem>>, vector<1x128x128xf32>
    %17 = vector.shape_cast %16 : vector<1x128x128xf32> to vector<128x128xf32>
    %cst_18 = arith.constant dense<0.000000e+00> : vector<64x128xf32>
    %18 = tpu.matmul %15, %17, %cst_18 {dimension_numbers = #tpu.dot_dimension_numbers<[1], [0], [0], [1], [0, 0, 1, 1], [], []>} : vector<64x128xf32>, vector<128x128xf32>, vector<64x128xf32> -> vector<64x128xf32>
    %c0_19 = arith.constant 0 : index
    %c0_20 = arith.constant 0 : index
    %c0_21 = arith.constant 0 : index
    %19 = vector.load %arg7[%c0_19, %c0_20, %c0_21] : memref<3x1x128xf32, #tpu.memory_space<vmem>>, vector<1x1x128xf32>
    %20 = vector.shape_cast %19 : vector<1x1x128xf32> to vector<1x128xf32>
    %21 = vector.broadcast %20 : vector<1x128xf32> to vector<64x128xf32>
    %22 = arith.addf %18, %21 : vector<64x128xf32>
    %cst_22 = arith.constant 0.000000e+00 : f32
    %23 = vector.broadcast %cst_22 : f32 to vector<64x128xf32>
    %24 = arith.maximumf %22, %23 : vector<64x128xf32>
    %25 = vector.broadcast %1 : vector<64x1xf32> to vector<64x128xf32>
    %26 = arith.mulf %24, %25 : vector<64x128xf32>
    %cst_23 = arith.constant dense<0.000000e+00> : vector<128xf32>
    %27 = vector.multi_reduction <add>, %26, %cst_23 [0] : vector<64x128xf32> to vector<128xf32>
    %28 = vector.shape_cast %27 : vector<128xf32> to vector<1x128xf32>
    %cst_24 = arith.constant 0.0185185187 : f32
    %29 = vector.broadcast %cst_24 : f32 to vector<1x128xf32>
    %30 = arith.mulf %28, %29 : vector<1x128xf32>
    %31 = vector.broadcast %30 : vector<1x128xf32> to vector<64x128xf32>
    %32 = arith.subf %24, %31 : vector<64x128xf32>
    %33 = vector.broadcast %1 : vector<64x1xf32> to vector<64x128xf32>
    %34 = arith.mulf %32, %33 : vector<64x128xf32>
    %35 = arith.mulf %34, %34 : vector<64x128xf32>
    %cst_25 = arith.constant dense<0.000000e+00> : vector<128xf32>
    %36 = vector.multi_reduction <add>, %35, %cst_25 [0] : vector<64x128xf32> to vector<128xf32>
    %37 = vector.shape_cast %36 : vector<128xf32> to vector<1x128xf32>
    %cst_26 = arith.constant 0.0185185187 : f32
    %38 = vector.broadcast %cst_26 : f32 to vector<1x128xf32>
    %39 = arith.mulf %37, %38 : vector<1x128xf32>
    %c0_27 = arith.constant 0 : index
    %c0_28 = arith.constant 0 : index
    %c0_29 = arith.constant 0 : index
    %40 = vector.load %arg8[%c0_27, %c0_28, %c0_29] : memref<3x1x128xf32, #tpu.memory_space<vmem>>, vector<1x1x128xf32>
    %41 = vector.shape_cast %40 : vector<1x1x128xf32> to vector<1x128xf32>
    %42 = vector.broadcast %30 : vector<1x128xf32> to vector<64x128xf32>
    %43 = arith.subf %24, %42 : vector<64x128xf32>
    %44 = vector.broadcast %41 : vector<1x128xf32> to vector<64x128xf32>
    %45 = arith.mulf %44, %43 : vector<64x128xf32>
    %cst_30 = arith.constant 9.99999974E-6 : f32
    %46 = vector.broadcast %cst_30 : f32 to vector<1x128xf32>
    %47 = arith.addf %39, %46 : vector<1x128xf32>
    %48 = math.rsqrt %47 : vector<1x128xf32>
    %49 = vector.broadcast %48 : vector<1x128xf32> to vector<64x128xf32>
    %50 = arith.mulf %45, %49 : vector<64x128xf32>
    %c0_31 = arith.constant 0 : index
    %c0_32 = arith.constant 0 : index
    %c0_33 = arith.constant 0 : index
    %51 = vector.load %arg9[%c0_31, %c0_32, %c0_33] : memref<3x1x128xf32, #tpu.memory_space<vmem>>, vector<1x1x128xf32>
    %52 = vector.shape_cast %51 : vector<1x1x128xf32> to vector<1x128xf32>
    %53 = vector.broadcast %52 : vector<1x128xf32> to vector<64x128xf32>
    %54 = arith.addf %50, %53 : vector<64x128xf32>
    %c0_34 = arith.constant 0 : index
    %c0_35 = arith.constant 0 : index
    %55 = vector.load %arg11[%c0_34, %c0_35] : memref<64x384xf32, #tpu.memory_space<vmem>>, vector<64x128xf32>
    tpu.vector_store %arg11[%c0_34, %c0_35], %54 {strides = array<i32>} : memref<64x384xf32, #tpu.memory_space<vmem>>, vector<64x128xf32>,
    %56 = vector.shape_cast %54 : vector<64x128xf32> to vector<4x16x128xf32>
    "tpu.trace_start"() <{level = 10 : i32, message = "gij,gjf->gif"}> : () -> ()
    %cst_36 = arith.constant dense<0.000000e+00> : vector<4x16x128xf32>
    %57 = tpu.matmul %0, %56, %cst_36 {dimension_numbers = #tpu.dot_dimension_numbers<[2], [1], [1], [2], [0, 0, 0, 1, 1, 2], [0], [0]>} : vector<4x16x16xf32>, vector<4x16x128xf32>, vector<4x16x128xf32> -> vector<4x16x128xf32>
    "tpu.trace_stop"() : () -> ()
    %58 = vector.shape_cast %57 : vector<4x16x128xf32> to vector<64x128xf32>
    %c1 = arith.constant 1 : index
    %c0_37 = arith.constant 0 : index
    %c0_38 = arith.constant 0 : index
    %59 = vector.load %arg4[%c1, %c0_37, %c0_38] : memref<3x128x128xf32, #tpu.memory_space<vmem>>, vector<1x128x128xf32>
    %60 = vector.shape_cast %59 : vector<1x128x128xf32> to vector<128x128xf32>
    %cst_39 = arith.constant dense<0.000000e+00> : vector<64x128xf32>
    %61 = tpu.matmul %58, %60, %cst_39 {dimension_numbers = #tpu.dot_dimension_numbers<[1], [0], [0], [1], [0, 0, 1, 1], [], []>} : vector<64x128xf32>, vector<128x128xf32>, vector<64x128xf32> -> vector<64x128xf32>
    %c1_40 = arith.constant 1 : index
    %c0_41 = arith.constant 0 : index
    %c0_42 = arith.constant 0 : index
    %62 = vector.load %arg5[%c1_40, %c0_41, %c0_42] : memref<3x1x128xf32, #tpu.memory_space<vmem>>, vector<1x1x128xf32>
    %63 = vector.shape_cast %62 : vector<1x1x128xf32> to vector<1x128xf32>
    %64 = vector.broadcast %63 : vector<1x128xf32> to vector<64x128xf32>
    %65 = arith.addf %61, %64 : vector<64x128xf32>
    %cst_43 = arith.constant 0.000000e+00 : f32
    %66 = vector.broadcast %cst_43 : f32 to vector<64x128xf32>
    %67 = arith.maximumf %65, %66 : vector<64x128xf32>
    %c1_44 = arith.constant 1 : index
    %c0_45 = arith.constant 0 : index
    %c0_46 = arith.constant 0 : index
    %68 = vector.load %arg6[%c1_44, %c0_45, %c0_46] : memref<3x128x128xf32, #tpu.memory_space<vmem>>, vector<1x128x128xf32>
    %69 = vector.shape_cast %68 : vector<1x128x128xf32> to vector<128x128xf32>
    %cst_47 = arith.constant dense<0.000000e+00> : vector<64x128xf32>
    %70 = tpu.matmul %67, %69, %cst_47 {dimension_numbers = #tpu.dot_dimension_numbers<[1], [0], [0], [1], [0, 0, 1, 1], [], []>} : vector<64x128xf32>, vector<128x128xf32>, vector<64x128xf32> -> vector<64x128xf32>
    %c1_48 = arith.constant 1 : index
    %c0_49 = arith.constant 0 : index
    %c0_50 = arith.constant 0 : index
    %71 = vector.load %arg7[%c1_48, %c0_49, %c0_50] : memref<3x1x128xf32, #tpu.memory_space<vmem>>, vector<1x1x128xf32>
    %72 = vector.shape_cast %71 : vector<1x1x128xf32> to vector<1x128xf32>
    %73 = vector.broadcast %72 : vector<1x128xf32> to vector<64x128xf32>
    %74 = arith.addf %70, %73 : vector<64x128xf32>
    %cst_51 = arith.constant 0.000000e+00 : f32
    %75 = vector.broadcast %cst_51 : f32 to vector<64x128xf32>
    %76 = arith.maximumf %74, %75 : vector<64x128xf32>
    %77 = vector.broadcast %1 : vector<64x1xf32> to vector<64x128xf32>
    %78 = arith.mulf %76, %77 : vector<64x128xf32>
    %cst_52 = arith.constant dense<0.000000e+00> : vector<128xf32>
    %79 = vector.multi_reduction <add>, %78, %cst_52 [0] : vector<64x128xf32> to vector<128xf32>
    %80 = vector.shape_cast %79 : vector<128xf32> to vector<1x128xf32>
    %cst_53 = arith.constant 0.0185185187 : f32
    %81 = vector.broadcast %cst_53 : f32 to vector<1x128xf32>
    %82 = arith.mulf %80, %81 : vector<1x128xf32>
    %83 = vector.broadcast %82 : vector<1x128xf32> to vector<64x128xf32>
    %84 = arith.subf %76, %83 : vector<64x128xf32>
    %85 = vector.broadcast %1 : vector<64x1xf32> to vector<64x128xf32>
    %86 = arith.mulf %84, %85 : vector<64x128xf32>
    %87 = arith.mulf %86, %86 : vector<64x128xf32>
    %cst_54 = arith.constant dense<0.000000e+00> : vector<128xf32>
    %88 = vector.multi_reduction <add>, %87, %cst_54 [0] : vector<64x128xf32> to vector<128xf32>
    %89 = vector.shape_cast %88 : vector<128xf32> to vector<1x128xf32>
    %cst_55 = arith.constant 0.0185185187 : f32
    %90 = vector.broadcast %cst_55 : f32 to vector<1x128xf32>
    %91 = arith.mulf %89, %90 : vector<1x128xf32>
    %c1_56 = arith.constant 1 : index
    %c0_57 = arith.constant 0 : index
    %c0_58 = arith.constant 0 : index
    %92 = vector.load %arg8[%c1_56, %c0_57, %c0_58] : memref<3x1x128xf32, #tpu.memory_space<vmem>>, vector<1x1x128xf32>
    %93 = vector.shape_cast %92 : vector<1x1x128xf32> to vector<1x128xf32>
    %94 = vector.broadcast %82 : vector<1x128xf32> to vector<64x128xf32>
    %95 = arith.subf %76, %94 : vector<64x128xf32>
    %96 = vector.broadcast %93 : vector<1x128xf32> to vector<64x128xf32>
    %97 = arith.mulf %96, %95 : vector<64x128xf32>
    %cst_59 = arith.constant 9.99999974E-6 : f32
    %98 = vector.broadcast %cst_59 : f32 to vector<1x128xf32>
    %99 = arith.addf %91, %98 : vector<1x128xf32>
    %100 = math.rsqrt %99 : vector<1x128xf32>
    %101 = vector.broadcast %100 : vector<1x128xf32> to vector<64x128xf32>
    %102 = arith.mulf %97, %101 : vector<64x128xf32>
    %c1_60 = arith.constant 1 : index
    %c0_61 = arith.constant 0 : index
    %c0_62 = arith.constant 0 : index
    %103 = vector.load %arg9[%c1_60, %c0_61, %c0_62] : memref<3x1x128xf32, #tpu.memory_space<vmem>>, vector<1x1x128xf32>
    %104 = vector.shape_cast %103 : vector<1x1x128xf32> to vector<1x128xf32>
    %105 = vector.broadcast %104 : vector<1x128xf32> to vector<64x128xf32>
    %106 = arith.addf %102, %105 : vector<64x128xf32>
    %c0_63 = arith.constant 0 : index
    %c128 = arith.constant 128 : index
    %107 = vector.load %arg11[%c0_63, %c128] : memref<64x384xf32, #tpu.memory_space<vmem>>, vector<64x128xf32>
    tpu.vector_store %arg11[%c0_63, %c128], %106 {strides = array<i32>} : memref<64x384xf32, #tpu.memory_space<vmem>>, vector<64x128xf32>,
    %108 = vector.shape_cast %106 : vector<64x128xf32> to vector<4x16x128xf32>
    "tpu.trace_start"() <{level = 10 : i32, message = "gij,gjf->gif"}> : () -> ()
    %cst_64 = arith.constant dense<0.000000e+00> : vector<4x16x128xf32>
    %109 = tpu.matmul %0, %108, %cst_64 {dimension_numbers = #tpu.dot_dimension_numbers<[2], [1], [1], [2], [0, 0, 0, 1, 1, 2], [0], [0]>} : vector<4x16x16xf32>, vector<4x16x128xf32>, vector<4x16x128xf32> -> vector<4x16x128xf32>
    "tpu.trace_stop"() : () -> ()
    %110 = vector.shape_cast %109 : vector<4x16x128xf32> to vector<64x128xf32>
    %c2 = arith.constant 2 : index
    %c0_65 = arith.constant 0 : index
    %c0_66 = arith.constant 0 : index
    %111 = vector.load %arg4[%c2, %c0_65, %c0_66] : memref<3x128x128xf32, #tpu.memory_space<vmem>>, vector<1x128x128xf32>
    %112 = vector.shape_cast %111 : vector<1x128x128xf32> to vector<128x128xf32>
    %cst_67 = arith.constant dense<0.000000e+00> : vector<64x128xf32>
    %113 = tpu.matmul %110, %112, %cst_67 {dimension_numbers = #tpu.dot_dimension_numbers<[1], [0], [0], [1], [0, 0, 1, 1], [], []>} : vector<64x128xf32>, vector<128x128xf32>, vector<64x128xf32> -> vector<64x128xf32>
    %c2_68 = arith.constant 2 : index
    %c0_69 = arith.constant 0 : index
    %c0_70 = arith.constant 0 : index
    %114 = vector.load %arg5[%c2_68, %c0_69, %c0_70] : memref<3x1x128xf32, #tpu.memory_space<vmem>>, vector<1x1x128xf32>
    %115 = vector.shape_cast %114 : vector<1x1x128xf32> to vector<1x128xf32>
    %116 = vector.broadcast %115 : vector<1x128xf32> to vector<64x128xf32>
    %117 = arith.addf %113, %116 : vector<64x128xf32>
    %cst_71 = arith.constant 0.000000e+00 : f32
    %118 = vector.broadcast %cst_71 : f32 to vector<64x128xf32>
    %119 = arith.maximumf %117, %118 : vector<64x128xf32>
    %c2_72 = arith.constant 2 : index
    %c0_73 = arith.constant 0 : index
    %c0_74 = arith.constant 0 : index
    %120 = vector.load %arg6[%c2_72, %c0_73, %c0_74] : memref<3x128x128xf32, #tpu.memory_space<vmem>>, vector<1x128x128xf32>
    %121 = vector.shape_cast %120 : vector<1x128x128xf32> to vector<128x128xf32>
    %cst_75 = arith.constant dense<0.000000e+00> : vector<64x128xf32>
    %122 = tpu.matmul %119, %121, %cst_75 {dimension_numbers = #tpu.dot_dimension_numbers<[1], [0], [0], [1], [0, 0, 1, 1], [], []>} : vector<64x128xf32>, vector<128x128xf32>, vector<64x128xf32> -> vector<64x128xf32>
    %c2_76 = arith.constant 2 : index
    %c0_77 = arith.constant 0 : index
    %c0_78 = arith.constant 0 : index
    %123 = vector.load %arg7[%c2_76, %c0_77, %c0_78] : memref<3x1x128xf32, #tpu.memory_space<vmem>>, vector<1x1x128xf32>
    %124 = vector.shape_cast %123 : vector<1x1x128xf32> to vector<1x128xf32>
    %125 = vector.broadcast %124 : vector<1x128xf32> to vector<64x128xf32>
    %126 = arith.addf %122, %125 : vector<64x128xf32>
    %cst_79 = arith.constant 0.000000e+00 : f32
    %127 = vector.broadcast %cst_79 : f32 to vector<64x128xf32>
    %128 = arith.maximumf %126, %127 : vector<64x128xf32>
    %129 = vector.broadcast %1 : vector<64x1xf32> to vector<64x128xf32>
    %130 = arith.mulf %128, %129 : vector<64x128xf32>
    %cst_80 = arith.constant dense<0.000000e+00> : vector<128xf32>
    %131 = vector.multi_reduction <add>, %130, %cst_80 [0] : vector<64x128xf32> to vector<128xf32>
    %132 = vector.shape_cast %131 : vector<128xf32> to vector<1x128xf32>
    %cst_81 = arith.constant 0.0185185187 : f32
    %133 = vector.broadcast %cst_81 : f32 to vector<1x128xf32>
    %134 = arith.mulf %132, %133 : vector<1x128xf32>
    %135 = vector.broadcast %134 : vector<1x128xf32> to vector<64x128xf32>
    %136 = arith.subf %128, %135 : vector<64x128xf32>
    %137 = vector.broadcast %1 : vector<64x1xf32> to vector<64x128xf32>
    %138 = arith.mulf %136, %137 : vector<64x128xf32>
    %139 = arith.mulf %138, %138 : vector<64x128xf32>
    %cst_82 = arith.constant dense<0.000000e+00> : vector<128xf32>
    %140 = vector.multi_reduction <add>, %139, %cst_82 [0] : vector<64x128xf32> to vector<128xf32>
    %141 = vector.shape_cast %140 : vector<128xf32> to vector<1x128xf32>
    %cst_83 = arith.constant 0.0185185187 : f32
    %142 = vector.broadcast %cst_83 : f32 to vector<1x128xf32>
    %143 = arith.mulf %141, %142 : vector<1x128xf32>
    %c2_84 = arith.constant 2 : index
    %c0_85 = arith.constant 0 : index
    %c0_86 = arith.constant 0 : index
    %144 = vector.load %arg8[%c2_84, %c0_85, %c0_86] : memref<3x1x128xf32, #tpu.memory_space<vmem>>, vector<1x1x128xf32>
    %145 = vector.shape_cast %144 : vector<1x1x128xf32> to vector<1x128xf32>
    %146 = vector.broadcast %134 : vector<1x128xf32> to vector<64x128xf32>
    %147 = arith.subf %128, %146 : vector<64x128xf32>
    %148 = vector.broadcast %145 : vector<1x128xf32> to vector<64x128xf32>
    %149 = arith.mulf %148, %147 : vector<64x128xf32>
    %cst_87 = arith.constant 9.99999974E-6 : f32
    %150 = vector.broadcast %cst_87 : f32 to vector<1x128xf32>
    %151 = arith.addf %143, %150 : vector<1x128xf32>
    %152 = math.rsqrt %151 : vector<1x128xf32>
    %153 = vector.broadcast %152 : vector<1x128xf32> to vector<64x128xf32>
    %154 = arith.mulf %149, %153 : vector<64x128xf32>
    %c2_88 = arith.constant 2 : index
    %c0_89 = arith.constant 0 : index
    %c0_90 = arith.constant 0 : index
    %155 = vector.load %arg9[%c2_88, %c0_89, %c0_90] : memref<3x1x128xf32, #tpu.memory_space<vmem>>, vector<1x1x128xf32>
    %156 = vector.shape_cast %155 : vector<1x1x128xf32> to vector<1x128xf32>
    %157 = vector.broadcast %156 : vector<1x128xf32> to vector<64x128xf32>
    %158 = arith.addf %154, %157 : vector<64x128xf32>
    %c0_91 = arith.constant 0 : index
    %c256 = arith.constant 256 : index
    %159 = vector.load %arg11[%c0_91, %c256] : memref<64x384xf32, #tpu.memory_space<vmem>>, vector<64x128xf32>
    tpu.vector_store %arg11[%c0_91, %c256], %158 {strides = array<i32>} : memref<64x384xf32, #tpu.memory_space<vmem>>, vector<64x128xf32>,
    %c0_92 = arith.constant 0 : index
    %c0_93 = arith.constant 0 : index
    %160 = vector.load %arg11[%c0_92, %c0_93] : memref<64x384xf32, #tpu.memory_space<vmem>>, vector<64x384xf32>
    %161 = vector.shape_cast %160 : vector<64x384xf32> to vector<4x16x384xf32>
    %c0_94 = arith.constant 0 : index
    %c0_95 = arith.constant 0 : index
    %c0_96 = arith.constant 0 : index
    %162 = vector.load %arg3[%c0_94, %c0_95, %c0_96] : memref<4x16x1xf32, #tpu.memory_space<vmem>>, vector<4x16x1xf32>
    %cst_97 = arith.constant 5.000000e-01 : f32
    %163 = vector.broadcast %cst_97 : f32 to vector<4x16x1xf32>
    %164 = arith.cmpf ogt, %162, %163 : vector<4x16x1xf32>
    %cst_98 = arith.constant 0xFF800000 : f32
    %165 = vector.shape_cast %164 : vector<4x16x1xi1> to vector<4x16x1xi1>
    %166 = vector.broadcast %165 : vector<4x16x1xi1> to vector<4x16x384xi1>
    %167 = vector.broadcast %cst_98 : f32 to vector<4x16x384xf32>
    %168 = arith.select %166, %161, %167 : vector<4x16x384xi1>, vector<4x16x384xf32>
    %cst_99 = arith.constant dense<0xFF800000> : vector<4x384xf32>
    %169 = vector.multi_reduction <maximumf>, %168, %cst_99 [1] : vector<4x16x384xf32> to vector<4x384xf32>
    %c0_100 = arith.constant 0 : index
    %c0_101 = arith.constant 0 : index
    %170 = vector.load %arg10[%c0_100, %c0_101] : memref<4x384xf32, #tpu.memory_space<vmem>>, vector<4x384xf32>
    tpu.vector_store %arg10[%c0_100, %c0_101], %169 {strides = array<i32>} : memref<4x384xf32, #tpu.memory_space<vmem>>, vector<4x384xf32>,
    return
  }
}

</mosaic_0001>

<llo_original>
// kernel: tpu_custom_call.1
$region0: #{tpu_custom_call.1}
  #allocation0 [shape = 'u32[]', space=smem, size = 0x4, offset = 0x4, fixed_abs, tag = 'smem constant byte address 0x4 - core index']
  #allocation1 [shape = 'u32[144,128]{1,0:T(1,128)}', space=vmem, size = 0x12000, scoped, tag = 'internal scratch']
  #allocation2 [shape = 'f32[64,384]{1,0:T(8,128)}', space=vmem, size = 0x18000, scoped, tag = 'scratch operand']
  %s0 = inlined_call_operand.vmem [shape: f32[4,16,128], index: 0, kind: input, shape index: {}]
  %s1 = inlined_call_operand.vmem [shape: f32[4,16,16], index: 1, kind: input, shape index: {}]
  %s2 = inlined_call_operand.vmem [shape: f32[64,1], index: 2, kind: input, shape index: {}]
  %s3 = inlined_call_operand.vmem [shape: f32[4,16,1], index: 3, kind: input, shape index: {}]
  %s4 = inlined_call_operand.hbm [shape: f32[3,128,128], index: 4, kind: input, shape index: {}]
  %s5 = inlined_call_operand.vmem [shape: f32[3,1,128], index: 5, kind: input, shape index: {}]
  %s6 = inlined_call_operand.hbm [shape: f32[3,128,128], index: 6, kind: input, shape index: {}]
  %s7 = inlined_call_operand.vmem [shape: f32[3,1,128], index: 7, kind: input, shape index: {}]
  %s8 = inlined_call_operand.vmem [shape: f32[3,1,128], index: 8, kind: input, shape index: {}]
  %s9 = inlined_call_operand.vmem [shape: f32[3,1,128], index: 9, kind: input, shape index: {}]
  %s10 = inlined_call_operand.hbm [shape: f32[4,384], index: 10, kind: output, shape index: {}]
  %s11 = sld [smem:[#allocation0]]
  $region58: #{tpu_custom_call.1} parent=0
    _
  %s13 = ssub.s32 1, %s11
  %s14 = scalar_select 0, %s13, %s11
  $region1: #{tpu_custom_call.1} parent=0
    #allocation3 [shape = 'u8[196608]{0}', space=vmem, size = 0x30000, scoped, tag = 'input window, operand 4, single buffered']
    #allocation4 [shape = 's32[1]{0}', space=sflag, size = 0x4, scoped, tag = 'scoped memory for tpu_custom_call.1']
    #allocation5 [shape = 's32[1]{0}', space=sflag, size = 0x4, scoped, tag = 'scoped memory for tpu_custom_call.1']
    #allocation6 [shape = 'u8[196608]{0}', space=vmem, size = 0x30000, scoped, tag = 'input window, operand 6, single buffered']
    #allocation7 [shape = 's32[1]{0}', space=sflag, size = 0x4, scoped, tag = 'scoped memory for tpu_custom_call.1']
    #allocation8 [shape = 'u8[6144]{0}', space=vmem, size = 0x1800, scoped, tag = 'output window, operand 0, single buffered']
    %15 = vsyncpa [#allocation4], 0
    %16 = vsyncpa [#allocation7], 0
    %17 = vsyncpa [#allocation5], 0
    // Predicated region
    $region2: #{tpu_custom_call.1} parent=1 // pred_check
      _
    $region3: #{tpu_custom_call.1} parent=1 // pred_check_branch
      %19 = sbr.rel (0) target = $region5
    $region4: #{tpu_custom_call.1} parent=1 // pred_region
      _
    $region5: #{tpu_custom_call.1} parent=1 // pred_fallthru
      _
    // Predicated region
    $region6: #{tpu_custom_call.1} parent=1 // pred_check
      _
    $region7: #{tpu_custom_call.1} parent=1 // pred_check_branch
      %21 = sbr.rel (0) target = $region9
    $region8: #{tpu_custom_call.1} parent=1 // pred_region
      _
    $region9: #{tpu_custom_call.1} parent=1 // pred_fallthru
      _
    // Predicated region
    $region10: #{tpu_custom_call.1} parent=1 // pred_check
      _
    $region11: #{tpu_custom_call.1} parent=1 // pred_check_branch
      %23 = sbr.rel (0) target = $region13
    $region12: #{tpu_custom_call.1} parent=1 // pred_region
      _
    $region13: #{tpu_custom_call.1} parent=1 // pred_fallthru
      _
    // Predicated region
    $region14: #{tpu_custom_call.1} parent=1 // pred_check
      _
    $region15: #{tpu_custom_call.1} parent=1 // pred_check_branch
      %25 = sbr.rel (0) target = $region17
    $region16: #{tpu_custom_call.1} parent=1 // pred_region
      _
    $region17: #{tpu_custom_call.1} parent=1 // pred_fallthru
      _
    // Predicated region
    $region18: #{tpu_custom_call.1} parent=1 // pred_check
      _
    $region19: #{tpu_custom_call.1} parent=1 // pred_check_branch
      %27 = sbr.rel (0) target = $region21
    $region20: #{tpu_custom_call.1} parent=1 // pred_region
      %s29 = ssub.s32 6144, 6144
      %30 = vsyncadd [#allocation4], %s29
      %s31 = sshll.u32 [#allocation3], 4
      %s32 = int_to_ptr.vmem [resolvable:$true] %s31
      %37 = dma.hbm_to_vmem [thread:$0]  %s4, 6144, %s32, [#allocation4], 128, 128, 8
    $region21: #{tpu_custom_call.1} parent=1 // pred_fallthru
      _
    // Predicated region
    $region22: #{tpu_custom_call.1} parent=1 // pred_check
      _
    $region23: #{tpu_custom_call.1} parent=1 // pred_check_branch
      %39 = sbr.rel (0) target = $region25
    $region24: #{tpu_custom_call.1} parent=1 // pred_region
      _
    $region25: #{tpu_custom_call.1} parent=1 // pred_fallthru
      _
    // Predicated region
    $region26: #{tpu_custom_call.1} parent=1 // pred_check
      _
    $region27: #{tpu_custom_call.1} parent=1 // pred_check_branch
      %41 = sbr.rel (0) target = $region29
    $region28: #{tpu_custom_call.1} parent=1 // pred_region
      %s43 = ssub.s32 6144, 6144
      %44 = vsyncadd [#allocation7], %s43
      %s45 = sshll.u32 [#allocation6], 4
      %s46 = int_to_ptr.vmem [resolvable:$true] %s45
      %51 = dma.hbm_to_vmem [thread:$0]  %s6, 6144, %s46, [#allocation7], 128, 128, 8
    $region29: #{tpu_custom_call.1} parent=1 // pred_fallthru
      _
    // Predicated region
    $region30: #{tpu_custom_call.1} parent=1 // pred_check
      _
    $region31: #{tpu_custom_call.1} parent=1 // pred_check_branch
      %53 = sbr.rel (0) target = $region33
    $region32: #{tpu_custom_call.1} parent=1 // pred_region
      _
    $region33: #{tpu_custom_call.1} parent=1 // pred_fallthru
      _
    // Predicated region
    $region34: #{tpu_custom_call.1} parent=1 // pred_check
      _
    $region35: #{tpu_custom_call.1} parent=1 // pred_check_branch
      %55 = sbr.rel (0) target = $region37
    $region36: #{tpu_custom_call.1} parent=1 // pred_region
      _
    $region37: #{tpu_custom_call.1} parent=1 // pred_fallthru
      _
    // Predicated region
    $region38: #{tpu_custom_call.1} parent=1 // pred_check
      _
    $region39: #{tpu_custom_call.1} parent=1 // pred_check_branch
      %57 = sbr.rel (0) target = $region41
    $region40: #{tpu_custom_call.1} parent=1 // pred_region
      _
    $region41: #{tpu_custom_call.1} parent=1 // pred_fallthru
      _
    // Predicated region
    $region42: #{tpu_custom_call.1} parent=1 // pred_check
      _
    $region43: #{tpu_custom_call.1} parent=1 // pred_check_branch
      %59 = sbr.rel (0) target = $region45
    $region44: #{tpu_custom_call.1} parent=1 // pred_region
      %60 = dma.done [#allocation4], 6144
    $region45: #{tpu_custom_call.1} parent=1 // pred_fallthru
      _
    // Predicated region
    $region46: #{tpu_custom_call.1} parent=1 // pred_check
      _
    $region47: #{tpu_custom_call.1} parent=1 // pred_check_branch
      %62 = sbr.rel (0) target = $region49
    $region48: #{tpu_custom_call.1} parent=1 // pred_region
      %63 = dma.done [#allocation7], 6144
    $region49: #{tpu_custom_call.1} parent=1 // pred_fallthru
      _
    %v64 = vld [vmem:[%s1] sm:$0xff]
    %v65 = vld [vmem:[%s1 + $0x8] sm:$0xff]
    %v66 = vld [vmem:[%s1 + $0x10] sm:$0xff]
    %v67 = vld [vmem:[%s1 + $0x18] sm:$0xff]
    %v68 = vld [vmem:[%s1 + $0x20] sm:$0xff]
    %v69 = vld [vmem:[%s1 + $0x28] sm:$0xff]
    %v70 = vld [vmem:[%s1 + $0x30] sm:$0xff]
    %v71 = vld [vmem:[%s1 + $0x38] sm:$0xff]
    %v72 = vld [vmem:[%s2] sm:$0xff]
    %v73 = vld [vmem:[%s2 + $0x8] sm:$0xff]
    %v74 = vld [vmem:[%s2 + $0x10] sm:$0xff]
    %v75 = vld [vmem:[%s2 + $0x18] sm:$0xff]
    %v76 = vld [vmem:[%s2 + $0x20] sm:$0xff]
    %v77 = vld [vmem:[%s2 + $0x28] sm:$0xff]
    %v78 = vld [vmem:[%s2 + $0x30] sm:$0xff]
    %v79 = vld [vmem:[%s2 + $0x38] sm:$0xff]
    %v80 = vld [vmem:[%s0] sm:$0xff]
    %v81 = vld [vmem:[%s0 + $0x8] sm:$0xff]
    %v82 = vld [vmem:[%s0 + $0x10] sm:$0xff]
    %v83 = vld [vmem:[%s0 + $0x18] sm:$0xff]
    %v84 = vld [vmem:[%s0 + $0x20] sm:$0xff]
    %v85 = vld [vmem:[%s0 + $0x28] sm:$0xff]
    %v86 = vld [vmem:[%s0 + $0x30] sm:$0xff]
    %v87 = vld [vmem:[%s0 + $0x38] sm:$0xff]
    %vm88 = vcmask 130048
    %v90 = vsel %vm88, %v64, 0
    %v93 = vsel %vm88, %v65, 0
    %95 = vmatprep.subr.mxu0 0.0
    %96 = vmatpush1.msra.mxu0 %v80
    %97 = vmatprep.subr.mxu0 0.0
    %98 = vmatpush1.msra.mxu0 %v81
    %99 = vmatprep.subr.mxu0 0.0
    %100 = vmatpush1.msra.mxu0 0.0
    %101 = vmatprep.subr.mxu0 0.0
    %102 = vmatpush1.msra.mxu0 0.0
    %103 = vmatprep.subr.mxu0 0.0
    %104 = vmatpush1.msra.mxu0 0.0
    %105 = vmatprep.subr.mxu0 0.0
    %106 = vmatpush1.msra.mxu0 0.0
    %107 = vmatprep.subr.mxu0 0.0
    %108 = vmatpush1.msra.mxu0 0.0
    %109 = vmatprep.subr.mxu0 0.0
    %110 = vmatpush1.msra.mxu0 0.0
    %111 = vmatprep.subr.mxu0 0.0
    %112 = vmatpush1.msra.mxu0 0.0
    %113 = vmatprep.subr.mxu0 0.0
    %114 = vmatpush1.msra.mxu0 0.0
    %115 = vmatprep.subr.mxu0 0.0
    %116 = vmatpush1.msra.mxu0 0.0
    %117 = vmatprep.subr.mxu0 0.0
    %118 = vmatpush1.msra.mxu0 0.0
    %119 = vmatprep.subr.mxu0 0.0
    %120 = vmatpush1.msra.mxu0 0.0
    %121 = vmatprep.subr.mxu0 0.0
    %122 = vmatpush1.msra.mxu0 0.0
    %123 = vmatprep.subr.mxu0 0.0
    %124 = vmatpush1.msra.mxu0 0.0
    %125 = vmatprep.subr.mxu0 0.0
    %126 = vmatpush1.msra.mxu0 0.0
    %127 = vmatprep.subr.mxu0 0.0
    %128 = vmatpush1.msra.mxu0 0.0
    %129 = vmatprep.subr.mxu0 0.0
    %130 = vmatpush1.msra.mxu0 0.0
    %131 = vmatprep.subr.mxu0 0.0
    %132 = vmatpush1.msra.mxu0 0.0
    %133 = vmatprep.subr.mxu0 0.0
    %134 = vmatpush1.msra.mxu0 0.0
    %135 = vmatprep.subr.mxu0 0.0
    %136 = vmatpush1.msra.mxu0 0.0
    %137 = vmatprep.subr.mxu0 0.0
    %138 = vmatpush1.msra.mxu0 0.0
    %139 = vmatprep.subr.mxu0 0.0
    %140 = vmatpush1.msra.mxu0 0.0
    %141 = vmatprep.subr.mxu0 0.0
    %142 = vmatpush1.msra.mxu0 0.0
    %143 = vmatprep.subr.mxu0 0.0
    %144 = vmatpush1.msra.mxu0 0.0
    %145 = vmatprep.subr.mxu0 0.0
    %146 = vmatpush1.msra.mxu0 0.0
    %147 = vmatprep.subr.mxu0 0.0
    %148 = vmatpush1.msra.mxu0 0.0
    %149 = vmatprep.subr.mxu0 0.0
    %150 = vmatpush1.msra.mxu0 0.0
    %151 = vmatprep.subr.mxu0 0.0
    %152 = vmatpush1.msra.mxu0 0.0
    %153 = vmatprep.subr.mxu0 0.0
    %154 = vmatpush1.msra.mxu0 0.0
    %155 = vmatprep.subr.mxu0 0.0
    %156 = vmatpush1.msra.mxu0 0.0
    %157 = vmatprep.subr.mxu0 0.0
    %158 = vmatpush1.msra.mxu0 0.0
    %159 = vmatprep.mubr.f32.mxu0 0.0
    %160 = vmatmul.mubr.f32.gmra.mrb[0].mxu0 %v90
    %v161 = vpop.f32.mrb[0].mxu0
    %v162 = vadd.f32 0.0, %v161
    %v163 = vpop.f32.mrb[0].mxu0
    %164 = vmatprep.mubr.f32.mxu0 0.0
    %165 = vmatmul.mubr.f32.gmra.mrb[0].mxu0 %v93
    %v166 = vpop.f32.mrb[0].mxu0
    %v167 = vadd.f32 0.0, %v166
    %v168 = vpop.f32.mrb[0].mxu0
    %169 = vdwg.mxu0
    %v171 = vsel %vm88, %v66, 0
    %v174 = vsel %vm88, %v67, 0
    %176 = vmatprep.subr.mxu0 0.0
    %177 = vmatpush1.msra.mxu0 %v82
    %178 = vmatprep.subr.mxu0 0.0
    %179 = vmatpush1.msra.mxu0 %v83
    %180 = vmatprep.subr.mxu0 0.0
    %181 = vmatpush1.msra.mxu0 0.0
    %182 = vmatprep.subr.mxu0 0.0
    %183 = vmatpush1.msra.mxu0 0.0
    %184 = vmatprep.subr.mxu0 0.0
    %185 = vmatpush1.msra.mxu0 0.0
    %186 = vmatprep.subr.mxu0 0.0
    %187 = vmatpush1.msra.mxu0 0.0
    %188 = vmatprep.subr.mxu0 0.0
    %189 = vmatpush1.msra.mxu0 0.0
    %190 = vmatprep.subr.mxu0 0.0
    %191 = vmatpush1.msra.mxu0 0.0
    %192 = vmatprep.subr.mxu0 0.0
    %193 = vmatpush1.msra.mxu0 0.0
    %194 = vmatprep.subr.mxu0 0.0
    %195 = vmatpush1.msra.mxu0 0.0
    %196 = vmatprep.subr.mxu0 0.0
    %197 = vmatpush1.msra.mxu0 0.0
    %198 = vmatprep.subr.mxu0 0.0
    %199 = vmatpush1.msra.mxu0 0.0
    %200 = vmatprep.subr.mxu0 0.0
    %201 = vmatpush1.msra.mxu0 0.0
    %202 = vmatprep.subr.mxu0 0.0
    %203 = vmatpush1.msra.mxu0 0.0
    %204 = vmatprep.subr.mxu0 0.0
    %205 = vmatpush1.msra.mxu0 0.0
    %206 = vmatprep.subr.mxu0 0.0
    %207 = vmatpush1.msra.mxu0 0.0
    %208 = vmatprep.subr.mxu0 0.0
    %209 = vmatpush1.msra.mxu0 0.0
    %210 = vmatprep.subr.mxu0 0.0
    %211 = vmatpush1.msra.mxu0 0.0
    %212 = vmatprep.subr.mxu0 0.0
    %213 = vmatpush1.msra.mxu0 0.0
    %214 = vmatprep.subr.mxu0 0.0
    %215 = vmatpush1.msra.mxu0 0.0
    %216 = vmatprep.subr.mxu0 0.0
    %217 = vmatpush1.msra.mxu0 0.0
    %218 = vmatprep.subr.mxu0 0.0
    %219 = vmatpush1.msra.mxu0 0.0
    %220 = vmatprep.subr.mxu0 0.0
    %221 = vmatpush1.msra.mxu0 0.0
    %222 = vmatprep.subr.mxu0 0.0
    %223 = vmatpush1.msra.mxu0 0.0
    %224 = vmatprep.subr.mxu0 0.0
    %225 = vmatpush1.msra.mxu0 0.0
    %226 = vmatprep.subr.mxu0 0.0
    %227 = vmatpush1.msra.mxu0 0.0
    %228 = vmatprep.subr.mxu0 0.0
    %229 = vmatpush1.msra.mxu0 0.0
    %230 = vmatprep.subr.mxu0 0.0
    %231 = vmatpush1.msra.mxu0 0.0
    %232 = vmatprep.subr.mxu0 0.0
    %233 = vmatpush1.msra.mxu0 0.0
    %234 = vmatprep.subr.mxu0 0.0
    %235 = vmatpush1.msra.mxu0 0.0
    %236 = vmatprep.subr.mxu0 0.0
    %237 = vmatpush1.msra.mxu0 0.0
    %238 = vmatprep.subr.mxu0 0.0
    %239 = vmatpush1.msra.mxu0 0.0
    %240 = vmatprep.mubr.f32.mxu0 0.0
    %241 = vmatmul.mubr.f32.gmra.mrb[0].mxu0 %v171
    %v242 = vpop.f32.mrb[0].mxu0
    %v243 = vadd.f32 0.0, %v242
    %v244 = vpop.f32.mrb[0].mxu0
    %245 = vmatprep.mubr.f32.mxu0 0.0
    %246 = vmatmul.mubr.f32.gmra.mrb[0].mxu0 %v174
    %v247 = vpop.f32.mrb[0].mxu0
    %v248 = vadd.f32 0.0, %v247
    %v249 = vpop.f32.mrb[0].mxu0
    %250 = vdwg.mxu0
    %v252 = vsel %vm88, %v68, 0
    %v255 = vsel %vm88, %v69, 0
    %257 = vmatprep.subr.mxu0 0.0
    %258 = vmatpush1.msra.mxu0 %v84
    %259 = vmatprep.subr.mxu0 0.0
    %260 = vmatpush1.msra.mxu0 %v85
    %261 = vmatprep.subr.mxu0 0.0
    %262 = vmatpush1.msra.mxu0 0.0
    %263 = vmatprep.subr.mxu0 0.0
    %264 = vmatpush1.msra.mxu0 0.0
    %265 = vmatprep.subr.mxu0 0.0
    %266 = vmatpush1.msra.mxu0 0.0
    %267 = vmatprep.subr.mxu0 0.0
    %268 = vmatpush1.msra.mxu0 0.0
    %269 = vmatprep.subr.mxu0 0.0
    %270 = vmatpush1.msra.mxu0 0.0
    %271 = vmatprep.subr.mxu0 0.0
    %272 = vmatpush1.msra.mxu0 0.0
    %273 = vmatprep.subr.mxu0 0.0
    %274 = vmatpush1.msra.mxu0 0.0
    %275 = vmatprep.subr.mxu0 0.0
    %276 = vmatpush1.msra.mxu0 0.0
    %277 = vmatprep.subr.mxu0 0.0
    %278 = vmatpush1.msra.mxu0 0.0
    %279 = vmatprep.subr.mxu0 0.0
    %280 = vmatpush1.msra.mxu0 0.0
    %281 = vmatprep.subr.mxu0 0.0
    %282 = vmatpush1.msra.mxu0 0.0
    %283 = vmatprep.subr.mxu0 0.0
    %284 = vmatpush1.msra.mxu0 0.0
    %285 = vmatprep.subr.mxu0 0.0
    %286 = vmatpush1.msra.mxu0 0.0
    %287 = vmatprep.subr.mxu0 0.0
    %288 = vmatpush1.msra.mxu0 0.0
    %289 = vmatprep.subr.mxu0 0.0
    %290 = vmatpush1.msra.mxu0 0.0
    %291 = vmatprep.subr.mxu0 0.0
    %292 = vmatpush1.msra.mxu0 0.0
    %293 = vmatprep.subr.mxu0 0.0
    %294 = vmatpush1.msra.mxu0 0.0
    %295 = vmatprep.subr.mxu0 0.0
    %296 = vmatpush1.msra.mxu0 0.0
    %297 = vmatprep.subr.mxu0 0.0
    %298 = vmatpush1.msra.mxu0 0.0
    %299 = vmatprep.subr.mxu0 0.0
    %300 = vmatpush1.msra.mxu0 0.0
    %301 = vmatprep.subr.mxu0 0.0
    %302 = vmatpush1.msra.mxu0 0.0
    %303 = vmatprep.subr.mxu0 0.0
    %304 = vmatpush1.msra.mxu0 0.0
    %305 = vmatprep.subr.mxu0 0.0
    %306 = vmatpush1.msra.mxu0 0.0
    %307 = vmatprep.subr.mxu0 0.0
    %308 = vmatpush1.msra.mxu0 0.0
    %309 = vmatprep.subr.mxu0 0.0
    %310 = vmatpush1.msra.mxu0 0.0
    %311 = vmatprep.subr.mxu0 0.0
    %312 = vmatpush1.msra.mxu0 0.0
    %313 = vmatprep.subr.mxu0 0.0
    %314 = vmatpush1.msra.mxu0 0.0
    %315 = vmatprep.subr.mxu0 0.0
    %316 = vmatpush1.msra.mxu0 0.0
    %317 = vmatprep.subr.mxu0 0.0
    %318 = vmatpush1.msra.mxu0 0.0
    %319 = vmatprep.subr.mxu0 0.0
    %320 = vmatpush1.msra.mxu0 0.0
    %321 = vmatprep.mubr.f32.mxu0 0.0
    %322 = vmatmul.mubr.f32.gmra.mrb[0].mxu0 %v252
    %v323 = vpop.f32.mrb[0].mxu0
    %v324 = vadd.f32 0.0, %v323
    %v325 = vpop.f32.mrb[0].mxu0
    %326 = vmatprep.mubr.f32.mxu0 0.0
    %327 = vmatmul.mubr.f32.gmra.mrb[0].mxu0 %v255
    %v328 = vpop.f32.mrb[0].mxu0
    %v329 = vadd.f32 0.0, %v328
    %v330 = vpop.f32.mrb[0].mxu0
    %331 = vdwg.mxu0
    %v333 = vsel %vm88, %v70, 0
    %v336 = vsel %vm88, %v71, 0
    %338 = vmatprep.subr.mxu0 0.0
    %339 = vmatpush1.msra.mxu0 %v86
    %340 = vmatprep.subr.mxu0 0.0
    %341 = vmatpush1.msra.mxu0 %v87
    %342 = vmatprep.subr.mxu0 0.0
    %343 = vmatpush1.msra.mxu0 0.0
    %344 = vmatprep.subr.mxu0 0.0
    %345 = vmatpush1.msra.mxu0 0.0
    %346 = vmatprep.subr.mxu0 0.0
    %347 = vmatpush1.msra.mxu0 0.0
    %348 = vmatprep.subr.mxu0 0.0
    %349 = vmatpush1.msra.mxu0 0.0
    %350 = vmatprep.subr.mxu0 0.0
    %351 = vmatpush1.msra.mxu0 0.0
    %352 = vmatprep.subr.mxu0 0.0
    %353 = vmatpush1.msra.mxu0 0.0
    %354 = vmatprep.subr.mxu0 0.0
    %355 = vmatpush1.msra.mxu0 0.0
    %356 = vmatprep.subr.mxu0 0.0
    %357 = vmatpush1.msra.mxu0 0.0
    %358 = vmatprep.subr.mxu0 0.0
    %359 = vmatpush1.msra.mxu0 0.0
    %360 = vmatprep.subr.mxu0 0.0
    %361 = vmatpush1.msra.mxu0 0.0
    %362 = vmatprep.subr.mxu0 0.0
    %363 = vmatpush1.msra.mxu0 0.0
    %364 = vmatprep.subr.mxu0 0.0
    %365 = vmatpush1.msra.mxu0 0.0
    %366 = vmatprep.subr.mxu0 0.0
    %367 = vmatpush1.msra.mxu0 0.0
    %368 = vmatprep.subr.mxu0 0.0
    %369 = vmatpush1.msra.mxu0 0.0
    %370 = vmatprep.subr.mxu0 0.0
    %371 = vmatpush1.msra.mxu0 0.0
    %372 = vmatprep.subr.mxu0 0.0
    %373 = vmatpush1.msra.mxu0 0.0
    %374 = vmatprep.subr.mxu0 0.0
    %375 = vmatpush1.msra.mxu0 0.0
    %376 = vmatprep.subr.mxu0 0.0
    %377 = vmatpush1.msra.mxu0 0.0
    %378 = vmatprep.subr.mxu0 0.0
    %379 = vmatpush1.msra.mxu0 0.0
    %380 = vmatprep.subr.mxu0 0.0
    %381 = vmatpush1.msra.mxu0 0.0
    %382 = vmatprep.subr.mxu0 0.0
    %383 = vmatpush1.msra.mxu0 0.0
    %384 = vmatprep.subr.mxu0 0.0
    %385 = vmatpush1.msra.mxu0 0.0
    %386 = vmatprep.subr.mxu0 0.0
    %387 = vmatpush1.msra.mxu0 0.0
    %388 = vmatprep.subr.mxu0 0.0
    %389 = vmatpush1.msra.mxu0 0.0
    %390 = vmatprep.subr.mxu0 0.0
    %391 = vmatpush1.msra.mxu0 0.0
    %392 = vmatprep.subr.mxu0 0.0
    %393 = vmatpush1.msra.mxu0 0.0
    %394 = vmatprep.subr.mxu0 0.0
    %395 = vmatpush1.msra.mxu0 0.0
    %396 = vmatprep.subr.mxu0 0.0
    %397 = vmatpush1.msra.mxu0 0.0
    %398 = vmatprep.subr.mxu0 0.0
    %399 = vmatpush1.msra.mxu0 0.0
    %400 = vmatprep.subr.mxu0 0.0
    %401 = vmatpush1.msra.mxu0 0.0
    %402 = vmatprep.mubr.f32.mxu0 0.0
    %403 = vmatmul.mubr.f32.gmra.mrb[0].mxu0 %v333
    %v404 = vpop.f32.mrb[0].mxu0
    %v405 = vadd.f32 0.0, %v404
    %v406 = vpop.f32.mrb[0].mxu0
    %407 = vmatprep.mubr.f32.mxu0 0.0
    %408 = vmatmul.mubr.f32.gmra.mrb[0].mxu0 %v336
    %v409 = vpop.f32.mrb[0].mxu0
    %v410 = vadd.f32 0.0, %v409
    %v411 = vpop.f32.mrb[0].mxu0
    %412 = vdwg.mxu0
    %v413 = vld [vmem:[#allocation3] sm:$0xff]
    %v414 = vld [vmem:[#allocation3 + $0x8] sm:$0xff]
    %v415 = vld [vmem:[#allocation3 + $0x10] sm:$0xff]
    %v416 = vld [vmem:[#allocation3 + $0x18] sm:$0xff]
    %v417 = vld [vmem:[#allocation3 + $0x20] sm:$0xff]
    %v418 = vld [vmem:[#allocation3 + $0x28] sm:$0xff]
    %v419 = vld [vmem:[#allocation3 + $0x30] sm:$0xff]
    %v420 = vld [vmem:[#allocation3 + $0x38] sm:$0xff]
    %v421 = vld [vmem:[#allocation3 + $0x40] sm:$0xff]
    %v422 = vld [vmem:[#allocation3 + $0x48] sm:$0xff]
    %v423 = vld [vmem:[#allocation3 + $0x50] sm:$0xff]
    %v424 = vld [vmem:[#allocation3 + $0x58] sm:$0xff]
    %v425 = vld [vmem:[#allocation3 + $0x60] sm:$0xff]
    %v426 = vld [vmem:[#allocation3 + $0x68] sm:$0xff]
    %v427 = vld [vmem:[#allocation3 + $0x70] sm:$0xff]
    %v428 = vld [vmem:[#allocation3 + $0x78] sm:$0xff]
    %v429 = vld [vmem:[%s5] sm:$0x1]
    %v431 = vlaneseq
    %v432 = vshrl.u32 %v431, 7
    %v433 = vsub.s32 0, %v432
    %v434 = vrot.slane %v429, %v433
    %436 = vmatprep.subr.mxu0 0.0
    %437 = vmatpush1.msra.mxu0 %v413
    %438 = vmatprep.subr.mxu0 0.0
    %439 = vmatpush1.msra.mxu0 %v414
    %440 = vmatprep.subr.mxu0 0.0
    %441 = vmatpush1.msra.mxu0 %v415
    %442 = vmatprep.subr.mxu0 0.0
    %443 = vmatpush1.msra.mxu0 %v416
    %444 = vmatprep.subr.mxu0 0.0
    %445 = vmatpush1.msra.mxu0 %v417
    %446 = vmatprep.subr.mxu0 0.0
    %447 = vmatpush1.msra.mxu0 %v418
    %448 = vmatprep.subr.mxu0 0.0
    %449 = vmatpush1.msra.mxu0 %v419
    %450 = vmatprep.subr.mxu0 0.0
    %451 = vmatpush1.msra.mxu0 %v420
    %452 = vmatprep.subr.mxu0 0.0
    %453 = vmatpush1.msra.mxu0 %v421
    %454 = vmatprep.subr.mxu0 0.0
    %455 = vmatpush1.msra.mxu0 %v422
    %456 = vmatprep.subr.mxu0 0.0
    %457 = vmatpush1.msra.mxu0 %v423
    %458 = vmatprep.subr.mxu0 0.0
    %459 = vmatpush1.msra.mxu0 %v424
    %460 = vmatprep.subr.mxu0 0.0
    %461 = vmatpush1.msra.mxu0 %v425
    %462 = vmatprep.subr.mxu0 0.0
    %463 = vmatpush1.msra.mxu0 %v426
    %464 = vmatprep.subr.mxu0 0.0
    %465 = vmatpush1.msra.mxu0 %v427
    %466 = vmatprep.subr.mxu0 0.0
    %467 = vmatpush1.msra.mxu0 %v428
    %468 = vmatprep.subr.mxu0 0.0
    %469 = vmatpush1.msra.mxu0 0.0
    %470 = vmatprep.subr.mxu0 0.0
    %471 = vmatpush1.msra.mxu0 0.0
    %472 = vmatprep.subr.mxu0 0.0
    %473 = vmatpush1.msra.mxu0 0.0
    %474 = vmatprep.subr.mxu0 0.0
    %475 = vmatpush1.msra.mxu0 0.0
    %476 = vmatprep.subr.mxu0 0.0
    %477 = vmatpush1.msra.mxu0 0.0
    %478 = vmatprep.subr.mxu0 0.0
    %479 = vmatpush1.msra.mxu0 0.0
    %480 = vmatprep.subr.mxu0 0.0
    %481 = vmatpush1.msra.mxu0 0.0
    %482 = vmatprep.subr.mxu0 0.0
    %483 = vmatpush1.msra.mxu0 0.0
    %484 = vmatprep.subr.mxu0 0.0
    %485 = vmatpush1.msra.mxu0 0.0
    %486 = vmatprep.subr.mxu0 0.0
    %487 = vmatpush1.msra.mxu0 0.0
    %488 = vmatprep.subr.mxu0 0.0
    %489 = vmatpush1.msra.mxu0 0.0
    %490 = vmatprep.subr.mxu0 0.0
    %491 = vmatpush1.msra.mxu0 0.0
    %492 = vmatprep.subr.mxu0 0.0
    %493 = vmatpush1.msra.mxu0 0.0
    %494 = vmatprep.subr.mxu0 0.0
    %495 = vmatpush1.msra.mxu0 0.0
    %496 = vmatprep.subr.mxu0 0.0
    %497 = vmatpush1.msra.mxu0 0.0
    %498 = vmatprep.subr.mxu0 0.0
    %499 = vmatpush1.msra.mxu0 0.0
    %500 = vmatprep.mubr.f32.mxu0 0.0
    %501 = vmatmul.mubr.f32.gmra.mrb[0].mxu0 %v162
    %v502 = vpop.f32.mrb[0].mxu0
    %v503 = vadd.f32 %v434, %v502
    %v504 = vpop.f32.mrb[0].mxu0
    %505 = vmatprep.mubr.f32.mxu0 0.0
    %506 = vmatmul.mubr.f32.gmra.mrb[0].mxu0 %v167
    %v507 = vpop.f32.mrb[0].mxu0
    %v508 = vadd.f32 %v434, %v507
    %v509 = vpop.f32.mrb[0].mxu0
    %510 = vmatprep.mubr.f32.mxu0 0.0
    %511 = vmatmul.mubr.f32.gmra.mrb[0].mxu0 %v243
    %v512 = vpop.f32.mrb[0].mxu0
    %v513 = vadd.f32 %v434, %v512
    %v514 = vpop.f32.mrb[0].mxu0
    %515 = vmatprep.mubr.f32.mxu0 0.0
    %516 = vmatmul.mubr.f32.gmra.mrb[0].mxu0 %v248
    %v517 = vpop.f32.mrb[0].mxu0
    %v518 = vadd.f32 %v434, %v517
    %v519 = vpop.f32.mrb[0].mxu0
    %520 = vmatprep.mubr.f32.mxu0 0.0
    %521 = vmatmul.mubr.f32.gmra.mrb[0].mxu0 %v324
    %v522 = vpop.f32.mrb[0].mxu0
    %v523 = vadd.f32 %v434, %v522
    %v524 = vpop.f32.mrb[0].mxu0
    %525 = vmatprep.mubr.f32.mxu0 0.0
    %526 = vmatmul.mubr.f32.gmra.mrb[0].mxu0 %v329
    %v527 = vpop.f32.mrb[0].mxu0
    %v528 = vadd.f32 %v434, %v527
    %v529 = vpop.f32.mrb[0].mxu0
    %530 = vmatprep.mubr.f32.mxu0 0.0
    %531 = vmatmul.mubr.f32.gmra.mrb[0].mxu0 %v405
    %v532 = vpop.f32.mrb[0].mxu0
    %v533 = vadd.f32 %v434, %v532
    %v534 = vpop.f32.mrb[0].mxu0
    %535 = vmatprep.mubr.f32.mxu0 0.0
    %536 = vmatmul.mubr.f32.gmra.mrb[0].mxu0 %v410
    %v537 = vpop.f32.mrb[0].mxu0
    %v538 = vadd.f32 %v434, %v537
    %v539 = vpop.f32.mrb[0].mxu0
    %540 = vdwg.mxu0
    %v541 = vmax.f32 %v503, 0.0
    %v542 = vmax.f32 %v508, 0.0
    %v543 = vmax.f32 %v513, 0.0
    %v544 = vmax.f32 %v518, 0.0
    %v545 = vmax.f32 %v523, 0.0
    %v546 = vmax.f32 %v528, 0.0
    %v547 = vmax.f32 %v533, 0.0
    %v548 = vmax.f32 %v538, 0.0
    %v549 = vld [vmem:[#allocation6] sm:$0xff]
    %v550 = vld [vmem:[#allocation6 + $0x8] sm:$0xff]
    %v551 = vld [vmem:[#allocation6 + $0x10] sm:$0xff]
    %v552 = vld [vmem:[#allocation6 + $0x18] sm:$0xff]
    %v553 = vld [vmem:[#allocation6 + $0x20] sm:$0xff]
    %v554 = vld [vmem:[#allocation6 + $0x28] sm:$0xff]
    %v555 = vld [vmem:[#allocation6 + $0x30] sm:$0xff]
    %v556 = vld [vmem:[#allocation6 + $0x38] sm:$0xff]
    %v557 = vld [vmem:[#allocation6 + $0x40] sm:$0xff]
    %v558 = vld [vmem:[#allocation6 + $0x48] sm:$0xff]
    %v559 = vld [vmem:[#allocation6 + $0x50] sm:$0xff]
    %v560 = vld [vmem:[#allocation6 + $0x58] sm:$0xff]
    %v561 = vld [vmem:[#allocation6 + $0x60] sm:$0xff]
    %v562 = vld [vmem:[#allocation6 + $0x68] sm:$0xff]
    %v563 = vld [vmem:[#allocation6 + $0x70] sm:$0xff]
    %v564 = vld [vmem:[#allocation6 + $0x78] sm:$0xff]
    %v565 = vld [vmem:[%s7] sm:$0x1]
    %v567 = vlaneseq
    %v568 = vshrl.u32 %v567, 7
    %v569 = vsub.s32 0, %v568
    %v570 = vrot.slane %v565, %v569
    %572 = vmatprep.subr.mxu0 0.0
    %573 = vmatpush1.msra.mxu0 %v549
    %574 = vmatprep.subr.mxu0 0.0
    %575 = vmatpush1.msra.mxu0 %v550
    %576 = vmatprep.subr.mxu0 0.0
    %577 = vmatpush1.msra.mxu0 %v551
    %578 = vmatprep.subr.mxu0 0.0
    %579 = vmatpush1.msra.mxu0 %v552
    %580 = vmatprep.subr.mxu0 0.0
    %581 = vmatpush1.msra.mxu0 %v553
    %582 = vmatprep.subr.mxu0 0.0
    %583 = vmatpush1.msra.mxu0 %v554
    %584 = vmatprep.subr.mxu0 0.0
    %585 = vmatpush1.msra.mxu0 %v555
    %586 = vmatprep.subr.mxu0 0.0
    %587 = vmatpush1.msra.mxu0 %v556
    %588 = vmatprep.subr.mxu0 0.0
    %589 = vmatpush1.msra.mxu0 %v557
    %590 = vmatprep.subr.mxu0 0.0
    %591 = vmatpush1.msra.mxu0 %v558
    %592 = vmatprep.subr.mxu0 0.0
    %593 = vmatpush1.msra.mxu0 %v559
    %594 = vmatprep.subr.mxu0 0.0
    %595 = vmatpush1.msra.mxu0 %v560
    %596 = vmatprep.subr.mxu0 0.0
    %597 = vmatpush1.msra.mxu0 %v561
    %598 = vmatprep.subr.mxu0 0.0
    %599 = vmatpush1.msra.mxu0 %v562
    %600 = vmatprep.subr.mxu0 0.0
    %601 = vmatpush1.msra.mxu0 %v563
    %602 = vmatprep.subr.mxu0 0.0
    %603 = vmatpush1.msra.mxu0 %v564
    %604 = vmatprep.subr.mxu0 0.0
    %605 = vmatpush1.msra.mxu0 0.0
    %606 = vmatprep.subr.mxu0 0.0
    %607 = vmatpush1.msra.mxu0 0.0
    %608 = vmatprep.subr.mxu0 0.0
    %609 = vmatpush1.msra.mxu0 0.0
    %610 = vmatprep.subr.mxu0 0.0
    %611 = vmatpush1.msra.mxu0 0.0
    %612 = vmatprep.subr.mxu0 0.0
    %613 = vmatpush1.msra.mxu0 0.0
    %614 = vmatprep.subr.mxu0 0.0
    %615 = vmatpush1.msra.mxu0 0.0
    %616 = vmatprep.subr.mxu0 0.0
    %617 = vmatpush1.msra.mxu0 0.0
    %618 = vmatprep.subr.mxu0 0.0
    %619 = vmatpush1.msra.mxu0 0.0
    %620 = vmatprep.subr.mxu0 0.0
    %621 = vmatpush1.msra.mxu0 0.0
    %622 = vmatprep.subr.mxu0 0.0
    %623 = vmatpush1.msra.mxu0 0.0
    %624 = vmatprep.subr.mxu0 0.0
    %625 = vmatpush1.msra.mxu0 0.0
    %626 = vmatprep.subr.mxu0 0.0
    %627 = vmatpush1.msra.mxu0 0.0
    %628 = vmatprep.subr.mxu0 0.0
    %629 = vmatpush1.msra.mxu0 0.0
    %630 = vmatprep.subr.mxu0 0.0
    %631 = vmatpush1.msra.mxu0 0.0
    %632 = vmatprep.subr.mxu0 0.0
    %633 = vmatpush1.msra.mxu0 0.0
    %634 = vmatprep.subr.mxu0 0.0
    %635 = vmatpush1.msra.mxu0 0.0
    %636 = vmatprep.mubr.f32.mxu0 0.0
    %637 = vmatmul.mubr.f32.gmra.mrb[0].mxu0 %v541
    %v638 = vpop.f32.mrb[0].mxu0
    %v639 = vadd.f32 %v570, %v638
    %v640 = vpop.f32.mrb[0].mxu0
    %641 = vmatprep.mubr.f32.mxu0 0.0
    %642 = vmatmul.mubr.f32.gmra.mrb[0].mxu0 %v542
    %v643 = vpop.f32.mrb[0].mxu0
    %v644 = vadd.f32 %v570, %v643
    %v645 = vpop.f32.mrb[0].mxu0
    %646 = vmatprep.mubr.f32.mxu0 0.0
    %647 = vmatmul.mubr.f32.gmra.mrb[0].mxu0 %v543
    %v648 = vpop.f32.mrb[0].mxu0
    %v649 = vadd.f32 %v570, %v648
    %v650 = vpop.f32.mrb[0].mxu0
    %651 = vmatprep.mubr.f32.mxu0 0.0
    %652 = vmatmul.mubr.f32.gmra.mrb[0].mxu0 %v544
    %v653 = vpop.f32.mrb[0].mxu0
    %v654 = vadd.f32 %v570, %v653
    %v655 = vpop.f32.mrb[0].mxu0
    %656 = vmatprep.mubr.f32.mxu0 0.0
    %657 = vmatmul.mubr.f32.gmra.mrb[0].mxu0 %v545
    %v658 = vpop.f32.mrb[0].mxu0
    %v659 = vadd.f32 %v570, %v658
    %v660 = vpop.f32.mrb[0].mxu0
    %661 = vmatprep.mubr.f32.mxu0 0.0
    %662 = vmatmul.mubr.f32.gmra.mrb[0].mxu0 %v546
    %v663 = vpop.f32.mrb[0].mxu0
    %v664 = vadd.f32 %v570, %v663
    %v665 = vpop.f32.mrb[0].mxu0
    %666 = vmatprep.mubr.f32.mxu0 0.0
    %667 = vmatmul.mubr.f32.gmra.mrb[0].mxu0 %v547
    %v668 = vpop.f32.mrb[0].mxu0
    %v669 = vadd.f32 %v570, %v668
    %v670 = vpop.f32.mrb[0].mxu0
    %671 = vmatprep.mubr.f32.mxu0 0.0
    %672 = vmatmul.mubr.f32.gmra.mrb[0].mxu0 %v548
    %v673 = vpop.f32.mrb[0].mxu0
    %v674 = vadd.f32 %v570, %v673
    %v675 = vpop.f32.mrb[0].mxu0
    %676 = vdwg.mxu0
    %v677 = vmax.f32 %v639, 0.0
    %v678 = vmax.f32 %v644, 0.0
    %v679 = vmax.f32 %v649, 0.0
    %v680 = vmax.f32 %v654, 0.0
    %v681 = vmax.f32 %v659, 0.0
    %v682 = vmax.f32 %v664, 0.0
    %v683 = vmax.f32 %v669, 0.0
    %v684 = vmax.f32 %v674, 0.0
    %686 = vset.pattern.permute.xlu0 0
    %687 = vperm.xlu0 %686, %v72
    %v688 = vpop.permute.xlu0 %687
    %691 = vset.pattern.permute.xlu0 0
    %692 = vperm.xlu0 %691, %v73
    %v693 = vpop.permute.xlu0 %692
    %696 = vset.pattern.permute.xlu0 0
    %697 = vperm.xlu0 %696, %v74
    %v698 = vpop.permute.xlu0 %697
    %701 = vset.pattern.permute.xlu0 0
    %702 = vperm.xlu0 %701, %v75
    %v703 = vpop.permute.xlu0 %702
    %706 = vset.pattern.permute.xlu0 0
    %707 = vperm.xlu0 %706, %v76
    %v708 = vpop.permute.xlu0 %707
    %711 = vset.pattern.permute.xlu0 0
    %712 = vperm.xlu0 %711, %v77
    %v713 = vpop.permute.xlu0 %712
    %716 = vset.pattern.permute.xlu0 0
    %717 = vperm.xlu0 %716, %v78
    %v718 = vpop.permute.xlu0 %717
    %721 = vset.pattern.permute.xlu0 0
    %722 = vperm.xlu0 %721, %v79
    %v723 = vpop.permute.xlu0 %722
    %v725 = vmul.f32 %v677, %v688
    %v726 = vmul.f32 %v678, %v693
    %v727 = vmul.f32 %v679, %v698
    %v728 = vmul.f32 %v680, %v703
    %v729 = vmul.f32 %v681, %v708
    %v730 = vmul.f32 %v682, %v713
    %v731 = vmul.f32 %v683, %v718
    %v732 = vmul.f32 %v684, %v723
    %v733 = vadd.f32 %v725, %v726
    %v734 = vadd.f32 %v733, %v727
    %v735 = vadd.f32 %v734, %v728
    %v736 = vadd.f32 %v735, %v729
    %v737 = vadd.f32 %v736, %v730
    %v738 = vadd.f32 %v737, %v731
    %v739 = vadd.f32 %v738, %v732
    %v740 = vrot.slane %v739, 4
    %v741 = vadd.f32 %v739, %v740
    %v742 = vrot.slane %v741, 2
    %v743 = vadd.f32 %v741, %v742
    %v744 = vrot.slane %v743, 1
    %v745 = vadd.f32 %v743, %v744
    %v746 = vmul.f32 %v745, 0.018518519
    %v747 = vsub.f32 %v677, %v746
    %v748 = vsub.f32 %v678, %v746
    %v749 = vsub.f32 %v679, %v746
    %v750 = vsub.f32 %v680, %v746
    %v751 = vsub.f32 %v681, %v746
    %v752 = vsub.f32 %v682, %v746
    %v753 = vsub.f32 %v683, %v746
    %v754 = vsub.f32 %v684, %v746
    %v755 = vmul.f32 %v747, %v688
    %v756 = vmul.f32 %v748, %v693
    %v757 = vmul.f32 %v749, %v698
    %v758 = vmul.f32 %v750, %v703
    %v759 = vmul.f32 %v751, %v708
    %v760 = vmul.f32 %v752, %v713
    %v761 = vmul.f32 %v753, %v718
    %v762 = vmul.f32 %v754, %v723
    %v763 = vmul.f32 %v755, %v755
    %v764 = vmul.f32 %v756, %v756
    %v765 = vmul.f32 %v757, %v757
    %v766 = vmul.f32 %v758, %v758
    %v767 = vmul.f32 %v759, %v759
    %v768 = vmul.f32 %v760, %v760
    %v769 = vmul.f32 %v761, %v761
    %v770 = vmul.f32 %v762, %v762
    %v771 = vadd.f32 %v763, %v764
    %v772 = vadd.f32 %v771, %v765
    %v773 = vadd.f32 %v772, %v766
    %v774 = vadd.f32 %v773, %v767
    %v775 = vadd.f32 %v774, %v768
    %v776 = vadd.f32 %v775, %v769
    %v777 = vadd.f32 %v776, %v770
    %v778 = vrot.slane %v777, 4
    %v779 = vadd.f32 %v777, %v778
    %v780 = vrot.slane %v779, 2
    %v781 = vadd.f32 %v779, %v780
    %v782 = vrot.slane %v781, 1
    %v783 = vadd.f32 %v781, %v782
    %v784 = vmul.f32 %v783, 0.018518519
    %v785 = vld [vmem:[%s8] sm:$0x1]
    %v787 = vlaneseq
    %v788 = vshrl.u32 %v787, 7
    %v789 = vsub.s32 0, %v788
    %v790 = vrot.slane %v785, %v789
    %v792 = vmul.f32 %v790, %v747
    %v793 = vmul.f32 %v790, %v748
    %v794 = vmul.f32 %v790, %v749
    %v795 = vmul.f32 %v790, %v750
    %v796 = vmul.f32 %v790, %v751
    %v797 = vmul.f32 %v790, %v752
    %v798 = vmul.f32 %v790, %v753
    %v799 = vmul.f32 %v790, %v754
    %v800 = vadd.f32 %v784, 1e-05
    %v801 = vrsqrt.pop %v800
    %v802 = vmul.f32 %v792, %v801
    %v803 = vmul.f32 %v793, %v801
    %v804 = vmul.f32 %v794, %v801
    %v805 = vmul.f32 %v795, %v801
    %v806 = vmul.f32 %v796, %v801
    %v807 = vmul.f32 %v797, %v801
    %v808 = vmul.f32 %v798, %v801
    %v809 = vmul.f32 %v799, %v801
    %v810 = vld [vmem:[%s9] sm:$0x1]
    %v812 = vlaneseq
    %v813 = vshrl.u32 %v812, 7
    %v814 = vsub.s32 0, %v813
    %v815 = vrot.slane %v810, %v814
    %v817 = vadd.f32 %v802, %v815
    %v818 = vadd.f32 %v803, %v815
    %v819 = vadd.f32 %v804, %v815
    %v820 = vadd.f32 %v805, %v815
    %v821 = vadd.f32 %v806, %v815
    %v822 = vadd.f32 %v807, %v815
    %v823 = vadd.f32 %v808, %v815
    %v824 = vadd.f32 %v809, %v815
    %825 = vst [vmem:[#allocation2] sm:$0xff] %v817
    %826 = vst [vmem:[#allocation2 + $0x18] sm:$0xff] %v818
    %827 = vst [vmem:[#allocation2 + $0x30] sm:$0xff] %v819
    %828 = vst [vmem:[#allocation2 + $0x48] sm:$0xff] %v820
    %829 = vst [vmem:[#allocation2 + $0x60] sm:$0xff] %v821
    %830 = vst [vmem:[#allocation2 + $0x78] sm:$0xff] %v822
    %831 = vst [vmem:[#allocation2 + $0x90] sm:$0xff] %v823
    %832 = vst [vmem:[#allocation2 + $0xa8] sm:$0xff] %v824
    %833 = vmatprep.subr.mxu0 0.0
    %834 = vmatpush1.msra.mxu0 %v817
    %835 = vmatprep.subr.mxu0 0.0
    %836 = vmatpush1.msra.mxu0 %v818
    %837 = vmatprep.subr.mxu0 0.0
    %838 = vmatpush1.msra.mxu0 0.0
    %839 = vmatprep.subr.mxu0 0.0
    %840 = vmatpush1.msra.mxu0 0.0
    %841 = vmatprep.subr.mxu0 0.0
    %842 = vmatpush1.msra.mxu0 0.0
    %843 = vmatprep.subr.mxu0 0.0
    %844 = vmatpush1.msra.mxu0 0.0
    %845 = vmatprep.subr.mxu0 0.0
    %846 = vmatpush1.msra.mxu0 0.0
    %847 = vmatprep.subr.mxu0 0.0
    %848 = vmatpush1.msra.mxu0 0.0
    %849 = vmatprep.subr.mxu0 0.0
    %850 = vmatpush1.msra.mxu0 0.0
    %851 = vmatprep.subr.mxu0 0.0
    %852 = vmatpush1.msra.mxu0 0.0
    %853 = vmatprep.subr.mxu0 0.0
    %854 = vmatpush1.msra.mxu0 0.0
    %855 = vmatprep.subr.mxu0 0.0
    %856 = vmatpush1.msra.mxu0 0.0
    %857 = vmatprep.subr.mxu0 0.0
    %858 = vmatpush1.msra.mxu0 0.0
    %859 = vmatprep.subr.mxu0 0.0
    %860 = vmatpush1.msra.mxu0 0.0
    %861 = vmatprep.subr.mxu0 0.0
    %862 = vmatpush1.msra.mxu0 0.0
    %863 = vmatprep.subr.mxu0 0.0
    %864 = vmatpush1.msra.mxu0 0.0
    %865 = vmatprep.subr.mxu0 0.0
    %866 = vmatpush1.msra.mxu0 0.0
    %867 = vmatprep.subr.mxu0 0.0
    %868 = vmatpush1.msra.mxu0 0.0
    %869 = vmatprep.subr.mxu0 0.0
    %870 = vmatpush1.msra.mxu0 0.0
    %871 = vmatprep.subr.mxu0 0.0
    %872 = vmatpush1.msra.mxu0 0.0
    %873 = vmatprep.subr.mxu0 0.0
    %874 = vmatpush1.msra.mxu0 0.0
    %875 = vmatprep.subr.mxu0 0.0
    %876 = vmatpush1.msra.mxu0 0.0
    %877 = vmatprep.subr.mxu0 0.0
    %878 = vmatpush1.msra.mxu0 0.0
    %879 = vmatprep.subr.mxu0 0.0
    %880 = vmatpush1.msra.mxu0 0.0
    %881 = vmatprep.subr.mxu0 0.0
    %882 = vmatpush1.msra.mxu0 0.0
    %883 = vmatprep.subr.mxu0 0.0
    %884 = vmatpush1.msra.mxu0 0.0
    %885 = vmatprep.subr.mxu0 0.0
    %886 = vmatpush1.msra.mxu0 0.0
    %887 = vmatprep.subr.mxu0 0.0
    %888 = vmatpush1.msra.mxu0 0.0
    %889 = vmatprep.subr.mxu0 0.0
    %890 = vmatpush1.msra.mxu0 0.0
    %891 = vmatprep.subr.mxu0 0.0
    %892 = vmatpush1.msra.mxu0 0.0
    %893 = vmatprep.subr.mxu0 0.0
    %894 = vmatpush1.msra.mxu0 0.0
    %895 = vmatprep.subr.mxu0 0.0
    %896 = vmatpush1.msra.mxu0 0.0
    %897 = vmatprep.mubr.f32.mxu0 0.0
    %898 = vmatmul.mubr.f32.gmra.mrb[0].mxu0 %v90
    %v899 = vpop.f32.mrb[0].mxu0
    %v900 = vadd.f32 0.0, %v899
    %v901 = vpop.f32.mrb[0].mxu0
    %902 = vmatprep.mubr.f32.mxu0 0.0
    %903 = vmatmul.mubr.f32.gmra.mrb[0].mxu0 %v93
    %v904 = vpop.f32.mrb[0].mxu0
    %v905 = vadd.f32 0.0, %v904
    %v906 = vpop.f32.mrb[0].mxu0
    %907 = vdwg.mxu0
    %908 = vmatprep.subr.mxu0 0.0
    %909 = vmatpush1.msra.mxu0 %v819
    %910 = vmatprep.subr.mxu0 0.0
    %911 = vmatpush1.msra.mxu0 %v820
    %912 = vmatprep.subr.mxu0 0.0
    %913 = vmatpush1.msra.mxu0 0.0
    %914 = vmatprep.subr.mxu0 0.0
    %915 = vmatpush1.msra.mxu0 0.0
    %916 = vmatprep.subr.mxu0 0.0
    %917 = vmatpush1.msra.mxu0 0.0
    %918 = vmatprep.subr.mxu0 0.0
    %919 = vmatpush1.msra.mxu0 0.0
    %920 = vmatprep.subr.mxu0 0.0
    %921 = vmatpush1.msra.mxu0 0.0
    %922 = vmatprep.subr.mxu0 0.0
    %923 = vmatpush1.msra.mxu0 0.0
    %924 = vmatprep.subr.mxu0 0.0
    %925 = vmatpush1.msra.mxu0 0.0
    %926 = vmatprep.subr.mxu0 0.0
    %927 = vmatpush1.msra.mxu0 0.0
    %928 = vmatprep.subr.mxu0 0.0
    %929 = vmatpush1.msra.mxu0 0.0
    %930 = vmatprep.subr.mxu0 0.0
    %931 = vmatpush1.msra.mxu0 0.0
    %932 = vmatprep.subr.mxu0 0.0
    %933 = vmatpush1.msra.mxu0 0.0
    %934 = vmatprep.subr.mxu0 0.0
    %935 = vmatpush1.msra.mxu0 0.0
    %936 = vmatprep.subr.mxu0 0.0
    %937 = vmatpush1.msra.mxu0 0.0
    %938 = vmatprep.subr.mxu0 0.0
    %939 = vmatpush1.msra.mxu0 0.0
    %940 = vmatprep.subr.mxu0 0.0
    %941 = vmatpush1.msra.mxu0 0.0
    %942 = vmatprep.subr.mxu0 0.0
    %943 = vmatpush1.msra.mxu0 0.0
    %944 = vmatprep.subr.mxu0 0.0
    %945 = vmatpush1.msra.mxu0 0.0
    %946 = vmatprep.subr.mxu0 0.0
    %947 = vmatpush1.msra.mxu0 0.0
    %948 = vmatprep.subr.mxu0 0.0
    %949 = vmatpush1.msra.mxu0 0.0
    %950 = vmatprep.subr.mxu0 0.0
    %951 = vmatpush1.msra.mxu0 0.0
    %952 = vmatprep.subr.mxu0 0.0
    %953 = vmatpush1.msra.mxu0 0.0
    %954 = vmatprep.subr.mxu0 0.0
    %955 = vmatpush1.msra.mxu0 0.0
    %956 = vmatprep.subr.mxu0 0.0
    %957 = vmatpush1.msra.mxu0 0.0
    %958 = vmatprep.subr.mxu0 0.0
    %959 = vmatpush1.msra.mxu0 0.0
    %960 = vmatprep.subr.mxu0 0.0
    %961 = vmatpush1.msra.mxu0 0.0
    %962 = vmatprep.subr.mxu0 0.0
    %963 = vmatpush1.msra.mxu0 0.0
    %964 = vmatprep.subr.mxu0 0.0
    %965 = vmatpush1.msra.mxu0 0.0
    %966 = vmatprep.subr.mxu0 0.0
    %967 = vmatpush1.msra.mxu0 0.0
    %968 = vmatprep.subr.mxu0 0.0
    %969 = vmatpush1.msra.mxu0 0.0
    %970 = vmatprep.subr.mxu0 0.0
    %971 = vmatpush1.msra.mxu0 0.0
    %972 = vmatprep.mubr.f32.mxu0 0.0
    %973 = vmatmul.mubr.f32.gmra.mrb[0].mxu0 %v171
    %v974 = vpop.f32.mrb[0].mxu0
    %v975 = vadd.f32 0.0, %v974
    %v976 = vpop.f32.mrb[0].mxu0
    %977 = vmatprep.mubr.f32.mxu0 0.0
    %978 = vmatmul.mubr.f32.gmra.mrb[0].mxu0 %v174
    %v979 = vpop.f32.mrb[0].mxu0
    %v980 = vadd.f32 0.0, %v979
    %v981 = vpop.f32.mrb[0].mxu0
    %982 = vdwg.mxu0
    %983 = vmatprep.subr.mxu0 0.0
    %984 = vmatpush1.msra.mxu0 %v821
    %985 = vmatprep.subr.mxu0 0.0
    %986 = vmatpush1.msra.mxu0 %v822
    %987 = vmatprep.subr.mxu0 0.0
    %988 = vmatpush1.msra.mxu0 0.0
    %989 = vmatprep.subr.mxu0 0.0
    %990 = vmatpush1.msra.mxu0 0.0
    %991 = vmatprep.subr.mxu0 0.0
    %992 = vmatpush1.msra.mxu0 0.0
    %993 = vmatprep.subr.mxu0 0.0
    %994 = vmatpush1.msra.mxu0 0.0
    %995 = vmatprep.subr.mxu0 0.0
    %996 = vmatpush1.msra.mxu0 0.0
    %997 = vmatprep.subr.mxu0 0.0
    %998 = vmatpush1.msra.mxu0 0.0
    %999 = vmatprep.subr.mxu0 0.0
    %1000 = vmatpush1.msra.mxu0 0.0
    %1001 = vmatprep.subr.mxu0 0.0
    %1002 = vmatpush1.msra.mxu0 0.0
    %1003 = vmatprep.subr.mxu0 0.0
    %1004 = vmatpush1.msra.mxu0 0.0
    %1005 = vmatprep.subr.mxu0 0.0
    %1006 = vmatpush1.msra.mxu0 0.0
    %1007 = vmatprep.subr.mxu0 0.0
    %1008 = vmatpush1.msra.mxu0 0.0
    %1009 = vmatprep.subr.mxu0 0.0
    %1010 = vmatpush1.msra.mxu0 0.0
    %1011 = vmatprep.subr.mxu0 0.0
    %1012 = vmatpush1.msra.mxu0 0.0
    %1013 = vmatprep.subr.mxu0 0.0
    %1014 = vmatpush1.msra.mxu0 0.0
    %1015 = vmatprep.subr.mxu0 0.0
    %1016 = vmatpush1.msra.mxu0 0.0
    %1017 = vmatprep.subr.mxu0 0.0
    %1018 = vmatpush1.msra.mxu0 0.0
    %1019 = vmatprep.subr.mxu0 0.0
    %1020 = vmatpush1.msra.mxu0 0.0
    %1021 = vmatprep.subr.mxu0 0.0
    %1022 = vmatpush1.msra.mxu0 0.0
    %1023 = vmatprep.subr.mxu0 0.0
    %1024 = vmatpush1.msra.mxu0 0.0
    %1025 = vmatprep.subr.mxu0 0.0
    %1026 = vmatpush1.msra.mxu0 0.0
    %1027 = vmatprep.subr.mxu0 0.0
    %1028 = vmatpush1.msra.mxu0 0.0
    %1029 = vmatprep.subr.mxu0 0.0
    %1030 = vmatpush1.msra.mxu0 0.0
    %1031 = vmatprep.subr.mxu0 0.0
    %1032 = vmatpush1.msra.mxu0 0.0
    %1033 = vmatprep.subr.mxu0 0.0
    %1034 = vmatpush1.msra.mxu0 0.0
    %1035 = vmatprep.subr.mxu0 0.0
    %1036 = vmatpush1.msra.mxu0 0.0
    %1037 = vmatprep.subr.mxu0 0.0
    %1038 = vmatpush1.msra.mxu0 0.0
    %1039 = vmatprep.subr.mxu0 0.0
    %1040 = vmatpush1.msra.mxu0 0.0
    %1041 = vmatprep.subr.mxu0 0.0
    %1042 = vmatpush1.msra.mxu0 0.0
    %1043 = vmatprep.subr.mxu0 0.0
    %1044 = vmatpush1.msra.mxu0 0.0
    %1045 = vmatprep.subr.mxu0 0.0
    %1046 = vmatpush1.msra.mxu0 0.0
    %1047 = vmatprep.mubr.f32.mxu0 0.0
    %1048 = vmatmul.mubr.f32.gmra.mrb[0].mxu0 %v252
    %v1049 = vpop.f32.mrb[0].mxu0
    %v1050 = vadd.f32 0.0, %v1049
    %v1051 = vpop.f32.mrb[0].mxu0
    %1052 = vmatprep.mubr.f32.mxu0 0.0
    %1053 = vmatmul.mubr.f32.gmra.mrb[0].mxu0 %v255
    %v1054 = vpop.f32.mrb[0].mxu0
    %v1055 = vadd.f32 0.0, %v1054
    %v1056 = vpop.f32.mrb[0].mxu0
    %1057 = vdwg.mxu0
    %1058 = vmatprep.subr.mxu0 0.0
    %1059 = vmatpush1.msra.mxu0 %v823
    %1060 = vmatprep.subr.mxu0 0.0
    %1061 = vmatpush1.msra.mxu0 %v824
    %1062 = vmatprep.subr.mxu0 0.0
    %1063 = vmatpush1.msra.mxu0 0.0
    %1064 = vmatprep.subr.mxu0 0.0
    %1065 = vmatpush1.msra.mxu0 0.0
    %1066 = vmatprep.subr.mxu0 0.0
    %1067 = vmatpush1.msra.mxu0 0.0
    %1068 = vmatprep.subr.mxu0 0.0
    %1069 = vmatpush1.msra.mxu0 0.0
    %1070 = vmatprep.subr.mxu0 0.0
    %1071 = vmatpush1.msra.mxu0 0.0
    %1072 = vmatprep.subr.mxu0 0.0
    %1073 = vmatpush1.msra.mxu0 0.0
    %1074 = vmatprep.subr.mxu0 0.0
    %1075 = vmatpush1.msra.mxu0 0.0
    %1076 = vmatprep.subr.mxu0 0.0
    %1077 = vmatpush1.msra.mxu0 0.0
    %1078 = vmatprep.subr.mxu0 0.0
    %1079 = vmatpush1.msra.mxu0 0.0
    %1080 = vmatprep.subr.mxu0 0.0
    %1081 = vmatpush1.msra.mxu0 0.0
    %1082 = vmatprep.subr.mxu0 0.0
    %1083 = vmatpush1.msra.mxu0 0.0
    %1084 = vmatprep.subr.mxu0 0.0
    %1085 = vmatpush1.msra.mxu0 0.0
    %1086 = vmatprep.subr.mxu0 0.0
    %1087 = vmatpush1.msra.mxu0 0.0
    %1088 = vmatprep.subr.mxu0 0.0
    %1089 = vmatpush1.msra.mxu0 0.0
    %1090 = vmatprep.subr.mxu0 0.0
    %1091 = vmatpush1.msra.mxu0 0.0
    %1092 = vmatprep.subr.mxu0 0.0
    %1093 = vmatpush1.msra.mxu0 0.0
    %1094 = vmatprep.subr.mxu0 0.0
    %1095 = vmatpush1.msra.mxu0 0.0
    %1096 = vmatprep.subr.mxu0 0.0
    %1097 = vmatpush1.msra.mxu0 0.0
    %1098 = vmatprep.subr.mxu0 0.0
    %1099 = vmatpush1.msra.mxu0 0.0
    %1100 = vmatprep.subr.mxu0 0.0
    %1101 = vmatpush1.msra.mxu0 0.0
    %1102 = vmatprep.subr.mxu0 0.0
    %1103 = vmatpush1.msra.mxu0 0.0
    %1104 = vmatprep.subr.mxu0 0.0
    %1105 = vmatpush1.msra.mxu0 0.0
    %1106 = vmatprep.subr.mxu0 0.0
    %1107 = vmatpush1.msra.mxu0 0.0
    %1108 = vmatprep.subr.mxu0 0.0
    %1109 = vmatpush1.msra.mxu0 0.0
    %1110 = vmatprep.subr.mxu0 0.0
    %1111 = vmatpush1.msra.mxu0 0.0
    %1112 = vmatprep.subr.mxu0 0.0
    %1113 = vmatpush1.msra.mxu0 0.0
    %1114 = vmatprep.subr.mxu0 0.0
    %1115 = vmatpush1.msra.mxu0 0.0
    %1116 = vmatprep.subr.mxu0 0.0
    %1117 = vmatpush1.msra.mxu0 0.0
    %1118 = vmatprep.subr.mxu0 0.0
    %1119 = vmatpush1.msra.mxu0 0.0
    %1120 = vmatprep.subr.mxu0 0.0
    %1121 = vmatpush1.msra.mxu0 0.0
    %1122 = vmatprep.mubr.f32.mxu0 0.0
    %1123 = vmatmul.mubr.f32.gmra.mrb[0].mxu0 %v333
    %v1124 = vpop.f32.mrb[0].mxu0
    %v1125 = vadd.f32 0.0, %v1124
    %v1126 = vpop.f32.mrb[0].mxu0
    %1127 = vmatprep.mubr.f32.mxu0 0.0
    %1128 = vmatmul.mubr.f32.gmra.mrb[0].mxu0 %v336
    %v1129 = vpop.f32.mrb[0].mxu0
    %v1130 = vadd.f32 0.0, %v1129
    %v1131 = vpop.f32.mrb[0].mxu0
    %1132 = vdwg.mxu0
    %s1133 = scalar_lea.vmem [#allocation3], 128
    %v1134 = vld [vmem:[%s1133] sm:$0xff]
    %v1135 = vld [vmem:[%s1133 + $0x8] sm:$0xff]
    %v1136 = vld [vmem:[%s1133 + $0x10] sm:$0xff]
    %v1137 = vld [vmem:[%s1133 + $0x18] sm:$0xff]
    %v1138 = vld [vmem:[%s1133 + $0x20] sm:$0xff]
    %v1139 = vld [vmem:[%s1133 + $0x28] sm:$0xff]
    %v1140 = vld [vmem:[%s1133 + $0x30] sm:$0xff]
    %v1141 = vld [vmem:[%s1133 + $0x38] sm:$0xff]
    %v1142 = vld [vmem:[%s1133 + $0x40] sm:$0xff]
    %v1143 = vld [vmem:[%s1133 + $0x48] sm:$0xff]
    %v1144 = vld [vmem:[%s1133 + $0x50] sm:$0xff]
    %v1145 = vld [vmem:[%s1133 + $0x58] sm:$0xff]
    %v1146 = vld [vmem:[%s1133 + $0x60] sm:$0xff]
    %v1147 = vld [vmem:[%s1133 + $0x68] sm:$0xff]
    %v1148 = vld [vmem:[%s1133 + $0x70] sm:$0xff]
    %v1149 = vld [vmem:[%s1133 + $0x78] sm:$0xff]
    %s1150 = scalar_lea.vmem %s5, 1
    %v1151 = vld [vmem:[%s1150] sm:$0x1]
    %v1153 = vlaneseq
    %v1154 = vshrl.u32 %v1153, 7
    %v1155 = vsub.s32 0, %v1154
    %v1156 = vrot.slane %v1151, %v1155
    %1158 = vmatprep.subr.mxu0 0.0
    %1159 = vmatpush1.msra.mxu0 %v1134
    %1160 = vmatprep.subr.mxu0 0.0
    %1161 = vmatpush1.msra.mxu0 %v1135
    %1162 = vmatprep.subr.mxu0 0.0
    %1163 = vmatpush1.msra.mxu0 %v1136
    %1164 = vmatprep.subr.mxu0 0.0
    %1165 = vmatpush1.msra.mxu0 %v1137
    %1166 = vmatprep.subr.mxu0 0.0
    %1167 = vmatpush1.msra.mxu0 %v1138
    %1168 = vmatprep.subr.mxu0 0.0
    %1169 = vmatpush1.msra.mxu0 %v1139
    %1170 = vmatprep.subr.mxu0 0.0
    %1171 = vmatpush1.msra.mxu0 %v1140
    %1172 = vmatprep.subr.mxu0 0.0
    %1173 = vmatpush1.msra.mxu0 %v1141
    %1174 = vmatprep.subr.mxu0 0.0
    %1175 = vmatpush1.msra.mxu0 %v1142
    %1176 = vmatprep.subr.mxu0 0.0
    %1177 = vmatpush1.msra.mxu0 %v1143
    %1178 = vmatprep.subr.mxu0 0.0
    %1179 = vmatpush1.msra.mxu0 %v1144
    %1180 = vmatprep.subr.mxu0 0.0
    %1181 = vmatpush1.msra.mxu0 %v1145
    %1182 = vmatprep.subr.mxu0 0.0
    %1183 = vmatpush1.msra.mxu0 %v1146
    %1184 = vmatprep.subr.mxu0 0.0
    %1185 = vmatpush1.msra.mxu0 %v1147
    %1186 = vmatprep.subr.mxu0 0.0
    %1187 = vmatpush1.msra.mxu0 %v1148
    %1188 = vmatprep.subr.mxu0 0.0
    %1189 = vmatpush1.msra.mxu0 %v1149
    %1190 = vmatprep.subr.mxu0 0.0
    %1191 = vmatpush1.msra.mxu0 0.0
    %1192 = vmatprep.subr.mxu0 0.0
    %1193 = vmatpush1.msra.mxu0 0.0
    %1194 = vmatprep.subr.mxu0 0.0
    %1195 = vmatpush1.msra.mxu0 0.0
    %1196 = vmatprep.subr.mxu0 0.0
    %1197 = vmatpush1.msra.mxu0 0.0
    %1198 = vmatprep.subr.mxu0 0.0
    %1199 = vmatpush1.msra.mxu0 0.0
    %1200 = vmatprep.subr.mxu0 0.0
    %1201 = vmatpush1.msra.mxu0 0.0
    %1202 = vmatprep.subr.mxu0 0.0
    %1203 = vmatpush1.msra.mxu0 0.0
    %1204 = vmatprep.subr.mxu0 0.0
    %1205 = vmatpush1.msra.mxu0 0.0
    %1206 = vmatprep.subr.mxu0 0.0
    %1207 = vmatpush1.msra.mxu0 0.0
    %1208 = vmatprep.subr.mxu0 0.0
    %1209 = vmatpush1.msra.mxu0 0.0
    %1210 = vmatprep.subr.mxu0 0.0
    %1211 = vmatpush1.msra.mxu0 0.0
    %1212 = vmatprep.subr.mxu0 0.0
    %1213 = vmatpush1.msra.mxu0 0.0
    %1214 = vmatprep.subr.mxu0 0.0
    %1215 = vmatpush1.msra.mxu0 0.0
    %1216 = vmatprep.subr.mxu0 0.0
    %1217 = vmatpush1.msra.mxu0 0.0
    %1218 = vmatprep.subr.mxu0 0.0
    %1219 = vmatpush1.msra.mxu0 0.0
    %1220 = vmatprep.subr.mxu0 0.0
    %1221 = vmatpush1.msra.mxu0 0.0
    %1222 = vmatprep.mubr.f32.mxu0 0.0
    %1223 = vmatmul.mubr.f32.gmra.mrb[0].mxu0 %v900
    %v1224 = vpop.f32.mrb[0].mxu0
    %v1225 = vadd.f32 %v1156, %v1224
    %v1226 = vpop.f32.mrb[0].mxu0
    %1227 = vmatprep.mubr.f32.mxu0 0.0
    %1228 = vmatmul.mubr.f32.gmra.mrb[0].mxu0 %v905
    %v1229 = vpop.f32.mrb[0].mxu0
    %v1230 = vadd.f32 %v1156, %v1229
    %v1231 = vpop.f32.mrb[0].mxu0
    %1232 = vmatprep.mubr.f32.mxu0 0.0
    %1233 = vmatmul.mubr.f32.gmra.mrb[0].mxu0 %v975
    %v1234 = vpop.f32.mrb[0].mxu0
    %v1235 = vadd.f32 %v1156, %v1234
    %v1236 = vpop.f32.mrb[0].mxu0
    %1237 = vmatprep.mubr.f32.mxu0 0.0
    %1238 = vmatmul.mubr.f32.gmra.mrb[0].mxu0 %v980
    %v1239 = vpop.f32.mrb[0].mxu0
    %v1240 = vadd.f32 %v1156, %v1239
    %v1241 = vpop.f32.mrb[0].mxu0
    %1242 = vmatprep.mubr.f32.mxu0 0.0
    %1243 = vmatmul.mubr.f32.gmra.mrb[0].mxu0 %v1050
    %v1244 = vpop.f32.mrb[0].mxu0
    %v1245 = vadd.f32 %v1156, %v1244
    %v1246 = vpop.f32.mrb[0].mxu0
    %1247 = vmatprep.mubr.f32.mxu0 0.0
    %1248 = vmatmul.mubr.f32.gmra.mrb[0].mxu0 %v1055
    %v1249 = vpop.f32.mrb[0].mxu0
    %v1250 = vadd.f32 %v1156, %v1249
    %v1251 = vpop.f32.mrb[0].mxu0
    %1252 = vmatprep.mubr.f32.mxu0 0.0
    %1253 = vmatmul.mubr.f32.gmra.mrb[0].mxu0 %v1125
    %v1254 = vpop.f32.mrb[0].mxu0
    %v1255 = vadd.f32 %v1156, %v1254
    %v1256 = vpop.f32.mrb[0].mxu0
    %1257 = vmatprep.mubr.f32.mxu0 0.0
    %1258 = vmatmul.mubr.f32.gmra.mrb[0].mxu0 %v1130
    %v1259 = vpop.f32.mrb[0].mxu0
    %v1260 = vadd.f32 %v1156, %v1259
    %v1261 = vpop.f32.mrb[0].mxu0
    %1262 = vdwg.mxu0
    %v1263 = vmax.f32 %v1225, 0.0
    %v1264 = vmax.f32 %v1230, 0.0
    %v1265 = vmax.f32 %v1235, 0.0
    %v1266 = vmax.f32 %v1240, 0.0
    %v1267 = vmax.f32 %v1245, 0.0
    %v1268 = vmax.f32 %v1250, 0.0
    %v1269 = vmax.f32 %v1255, 0.0
    %v1270 = vmax.f32 %v1260, 0.0
    %s1271 = scalar_lea.vmem [#allocation6], 128
    %v1272 = vld [vmem:[%s1271] sm:$0xff]
    %v1273 = vld [vmem:[%s1271 + $0x8] sm:$0xff]
    %v1274 = vld [vmem:[%s1271 + $0x10] sm:$0xff]
    %v1275 = vld [vmem:[%s1271 + $0x18] sm:$0xff]
    %v1276 = vld [vmem:[%s1271 + $0x20] sm:$0xff]
    %v1277 = vld [vmem:[%s1271 + $0x28] sm:$0xff]
    %v1278 = vld [vmem:[%s1271 + $0x30] sm:$0xff]
    %v1279 = vld [vmem:[%s1271 + $0x38] sm:$0xff]
    %v1280 = vld [vmem:[%s1271 + $0x40] sm:$0xff]
    %v1281 = vld [vmem:[%s1271 + $0x48] sm:$0xff]
    %v1282 = vld [vmem:[%s1271 + $0x50] sm:$0xff]
    %v1283 = vld [vmem:[%s1271 + $0x58] sm:$0xff]
    %v1284 = vld [vmem:[%s1271 + $0x60] sm:$0xff]
    %v1285 = vld [vmem:[%s1271 + $0x68] sm:$0xff]
    %v1286 = vld [vmem:[%s1271 + $0x70] sm:$0xff]
    %v1287 = vld [vmem:[%s1271 + $0x78] sm:$0xff]
    %s1288 = scalar_lea.vmem %s7, 1
    %v1289 = vld [vmem:[%s1288] sm:$0x1]
    %v1291 = vlaneseq
    %v1292 = vshrl.u32 %v1291, 7
    %v1293 = vsub.s32 0, %v1292
    %v1294 = vrot.slane %v1289, %v1293
    %1296 = vmatprep.subr.mxu0 0.0
    %1297 = vmatpush1.msra.mxu0 %v1272
    %1298 = vmatprep.subr.mxu0 0.0
    %1299 = vmatpush1.msra.mxu0 %v1273
    %1300 = vmatprep.subr.mxu0 0.0
    %1301 = vmatpush1.msra.mxu0 %v1274
    %1302 = vmatprep.subr.mxu0 0.0
    %1303 = vmatpush1.msra.mxu0 %v1275
    %1304 = vmatprep.subr.mxu0 0.0
    %1305 = vmatpush1.msra.mxu0 %v1276
    %1306 = vmatprep.subr.mxu0 0.0
    %1307 = vmatpush1.msra.mxu0 %v1277
    %1308 = vmatprep.subr.mxu0 0.0
    %1309 = vmatpush1.msra.mxu0 %v1278
    %1310 = vmatprep.subr.mxu0 0.0
    %1311 = vmatpush1.msra.mxu0 %v1279
    %1312 = vmatprep.subr.mxu0 0.0
    %1313 = vmatpush1.msra.mxu0 %v1280
    %1314 = vmatprep.subr.mxu0 0.0
    %1315 = vmatpush1.msra.mxu0 %v1281
    %1316 = vmatprep.subr.mxu0 0.0
    %1317 = vmatpush1.msra.mxu0 %v1282
    %1318 = vmatprep.subr.mxu0 0.0
    %1319 = vmatpush1.msra.mxu0 %v1283
    %1320 = vmatprep.subr.mxu0 0.0
    %1321 = vmatpush1.msra.mxu0 %v1284
    %1322 = vmatprep.subr.mxu0 0.0
    %1323 = vmatpush1.msra.mxu0 %v1285
    %1324 = vmatprep.subr.mxu0 0.0
    %1325 = vmatpush1.msra.mxu0 %v1286
    %1326 = vmatprep.subr.mxu0 0.0
    %1327 = vmatpush1.msra.mxu0 %v1287
    %1328 = vmatprep.subr.mxu0 0.0
    %1329 = vmatpush1.msra.mxu0 0.0
    %1330 = vmatprep.subr.mxu0 0.0
    %1331 = vmatpush1.msra.mxu0 0.0
    %1332 = vmatprep.subr.mxu0 0.0
    %1333 = vmatpush1.msra.mxu0 0.0
    %1334 = vmatprep.subr.mxu0 0.0
    %1335 = vmatpush1.msra.mxu0 0.0
    %1336 = vmatprep.subr.mxu0 0.0
    %1337 = vmatpush1.msra.mxu0 0.0
    %1338 = vmatprep.subr.mxu0 0.0
    %1339 = vmatpush1.msra.mxu0 0.0
    %1340 = vmatprep.subr.mxu0 0.0
    %1341 = vmatpush1.msra.mxu0 0.0
    %1342 = vmatprep.subr.mxu0 0.0
    %1343 = vmatpush1.msra.mxu0 0.0
    %1344 = vmatprep.subr.mxu0 0.0
    %1345 = vmatpush1.msra.mxu0 0.0
    %1346 = vmatprep.subr.mxu0 0.0
    %1347 = vmatpush1.msra.mxu0 0.0
    %1348 = vmatprep.subr.mxu0 0.0
    %1349 = vmatpush1.msra.mxu0 0.0
    %1350 = vmatprep.subr.mxu0 0.0
    %1351 = vmatpush1.msra.mxu0 0.0
    %1352 = vmatprep.subr.mxu0 0.0
    %1353 = vmatpush1.msra.mxu0 0.0
    %1354 = vmatprep.subr.mxu0 0.0
    %1355 = vmatpush1.msra.mxu0 0.0
    %1356 = vmatprep.subr.mxu0 0.0
    %1357 = vmatpush1.msra.mxu0 0.0
    %1358 = vmatprep.subr.mxu0 0.0
    %1359 = vmatpush1.msra.mxu0 0.0
    %1360 = vmatprep.mubr.f32.mxu0 0.0
    %1361 = vmatmul.mubr.f32.gmra.mrb[0].mxu0 %v1263
    %v1362 = vpop.f32.mrb[0].mxu0
    %v1363 = vadd.f32 %v1294, %v1362
    %v1364 = vpop.f32.mrb[0].mxu0
    %1365 = vmatprep.mubr.f32.mxu0 0.0
    %1366 = vmatmul.mubr.f32.gmra.mrb[0].mxu0 %v1264
    %v1367 = vpop.f32.mrb[0].mxu0
    %v1368 = vadd.f32 %v1294, %v1367
    %v1369 = vpop.f32.mrb[0].mxu0
    %1370 = vmatprep.mubr.f32.mxu0 0.0
    %1371 = vmatmul.mubr.f32.gmra.mrb[0].mxu0 %v1265
    %v1372 = vpop.f32.mrb[0].mxu0
    %v1373 = vadd.f32 %v1294, %v1372
    %v1374 = vpop.f32.mrb[0].mxu0
    %1375 = vmatprep.mubr.f32.mxu0 0.0
    %1376 = vmatmul.mubr.f32.gmra.mrb[0].mxu0 %v1266
    %v1377 = vpop.f32.mrb[0].mxu0
    %v1378 = vadd.f32 %v1294, %v1377
    %v1379 = vpop.f32.mrb[0].mxu0
    %1380 = vmatprep.mubr.f32.mxu0 0.0
    %1381 = vmatmul.mubr.f32.gmra.mrb[0].mxu0 %v1267
    %v1382 = vpop.f32.mrb[0].mxu0
    %v1383 = vadd.f32 %v1294, %v1382
    %v1384 = vpop.f32.mrb[0].mxu0
    %1385 = vmatprep.mubr.f32.mxu0 0.0
    %1386 = vmatmul.mubr.f32.gmra.mrb[0].mxu0 %v1268
    %v1387 = vpop.f32.mrb[0].mxu0
    %v1388 = vadd.f32 %v1294, %v1387
    %v1389 = vpop.f32.mrb[0].mxu0
    %1390 = vmatprep.mubr.f32.mxu0 0.0
    %1391 = vmatmul.mubr.f32.gmra.mrb[0].mxu0 %v1269
    %v1392 = vpop.f32.mrb[0].mxu0
    %v1393 = vadd.f32 %v1294, %v1392
    %v1394 = vpop.f32.mrb[0].mxu0
    %1395 = vmatprep.mubr.f32.mxu0 0.0
    %1396 = vmatmul.mubr.f32.gmra.mrb[0].mxu0 %v1270
    %v1397 = vpop.f32.mrb[0].mxu0
    %v1398 = vadd.f32 %v1294, %v1397
    %v1399 = vpop.f32.mrb[0].mxu0
    %1400 = vdwg.mxu0
    %v1401 = vmax.f32 %v1363, 0.0
    %v1402 = vmax.f32 %v1368, 0.0
    %v1403 = vmax.f32 %v1373, 0.0
    %v1404 = vmax.f32 %v1378, 0.0
    %v1405 = vmax.f32 %v1383, 0.0
    %v1406 = vmax.f32 %v1388, 0.0
    %v1407 = vmax.f32 %v1393, 0.0
    %v1408 = vmax.f32 %v1398, 0.0
    %v1409 = vmul.f32 %v1401, %v688
    %v1410 = vmul.f32 %v1402, %v693
    %v1411 = vmul.f32 %v1403, %v698
    %v1412 = vmul.f32 %v1404, %v703
    %v1413 = vmul.f32 %v1405, %v708
    %v1414 = vmul.f32 %v1406, %v713
    %v1415 = vmul.f32 %v1407, %v718
    %v1416 = vmul.f32 %v1408, %v723
    %v1417 = vadd.f32 %v1409, %v1410
    %v1418 = vadd.f32 %v1417, %v1411
    %v1419 = vadd.f32 %v1418, %v1412
    %v1420 = vadd.f32 %v1419, %v1413
    %v1421 = vadd.f32 %v1420, %v1414
    %v1422 = vadd.f32 %v1421, %v1415
    %v1423 = vadd.f32 %v1422, %v1416
    %v1424 = vrot.slane %v1423, 4
    %v1425 = vadd.f32 %v1423, %v1424
    %v1426 = vrot.slane %v1425, 2
    %v1427 = vadd.f32 %v1425, %v1426
    %v1428 = vrot.slane %v1427, 1
    %v1429 = vadd.f32 %v1427, %v1428
    %v1430 = vmul.f32 %v1429, 0.018518519
    %v1431 = vsub.f32 %v1401, %v1430
    %v1432 = vsub.f32 %v1402, %v1430
    %v1433 = vsub.f32 %v1403, %v1430
    %v1434 = vsub.f32 %v1404, %v1430
    %v1435 = vsub.f32 %v1405, %v1430
    %v1436 = vsub.f32 %v1406, %v1430
    %v1437 = vsub.f32 %v1407, %v1430
    %v1438 = vsub.f32 %v1408, %v1430
    %v1439 = vmul.f32 %v1431, %v688
    %v1440 = vmul.f32 %v1432, %v693
    %v1441 = vmul.f32 %v1433, %v698
    %v1442 = vmul.f32 %v1434, %v703
    %v1443 = vmul.f32 %v1435, %v708
    %v1444 = vmul.f32 %v1436, %v713
    %v1445 = vmul.f32 %v1437, %v718
    %v1446 = vmul.f32 %v1438, %v723
    %v1447 = vmul.f32 %v1439, %v1439
    %v1448 = vmul.f32 %v1440, %v1440
    %v1449 = vmul.f32 %v1441, %v1441
    %v1450 = vmul.f32 %v1442, %v1442
    %v1451 = vmul.f32 %v1443, %v1443
    %v1452 = vmul.f32 %v1444, %v1444
    %v1453 = vmul.f32 %v1445, %v1445
    %v1454 = vmul.f32 %v1446, %v1446
    %v1455 = vadd.f32 %v1447, %v1448
    %v1456 = vadd.f32 %v1455, %v1449
    %v1457 = vadd.f32 %v1456, %v1450
    %v1458 = vadd.f32 %v1457, %v1451
    %v1459 = vadd.f32 %v1458, %v1452
    %v1460 = vadd.f32 %v1459, %v1453
    %v1461 = vadd.f32 %v1460, %v1454
    %v1462 = vrot.slane %v1461, 4
    %v1463 = vadd.f32 %v1461, %v1462
    %v1464 = vrot.slane %v1463, 2
    %v1465 = vadd.f32 %v1463, %v1464
    %v1466 = vrot.slane %v1465, 1
    %v1467 = vadd.f32 %v1465, %v1466
    %v1468 = vmul.f32 %v1467, 0.018518519
    %s1469 = scalar_lea.vmem %s8, 1
    %v1470 = vld [vmem:[%s1469] sm:$0x1]
    %v1472 = vlaneseq
    %v1473 = vshrl.u32 %v1472, 7
    %v1474 = vsub.s32 0, %v1473
    %v1475 = vrot.slane %v1470, %v1474
    %v1477 = vmul.f32 %v1475, %v1431
    %v1478 = vmul.f32 %v1475, %v1432
    %v1479 = vmul.f32 %v1475, %v1433
    %v1480 = vmul.f32 %v1475, %v1434
    %v1481 = vmul.f32 %v1475, %v1435
    %v1482 = vmul.f32 %v1475, %v1436
    %v1483 = vmul.f32 %v1475, %v1437
    %v1484 = vmul.f32 %v1475, %v1438
    %v1485 = vadd.f32 %v1468, 1e-05
    %v1486 = vrsqrt.pop %v1485
    %v1487 = vmul.f32 %v1477, %v1486
    %v1488 = vmul.f32 %v1478, %v1486
    %v1489 = vmul.f32 %v1479, %v1486
    %v1490 = vmul.f32 %v1480, %v1486
    %v1491 = vmul.f32 %v1481, %v1486
    %v1492 = vmul.f32 %v1482, %v1486
    %v1493 = vmul.f32 %v1483, %v1486
    %v1494 = vmul.f32 %v1484, %v1486
    %s1495 = scalar_lea.vmem %s9, 1
    %v1496 = vld [vmem:[%s1495] sm:$0x1]
    %v1498 = vlaneseq
    %v1499 = vshrl.u32 %v1498, 7
    %v1500 = vsub.s32 0, %v1499
    %v1501 = vrot.slane %v1496, %v1500
    %v1503 = vadd.f32 %v1487, %v1501
    %v1504 = vadd.f32 %v1488, %v1501
    %v1505 = vadd.f32 %v1489, %v1501
    %v1506 = vadd.f32 %v1490, %v1501
    %v1507 = vadd.f32 %v1491, %v1501
    %v1508 = vadd.f32 %v1492, %v1501
    %v1509 = vadd.f32 %v1493, %v1501
    %v1510 = vadd.f32 %v1494, %v1501
    %1511 = vst [vmem:[#allocation2 + $0x8] sm:$0xff] %v1503
    %1512 = vst [vmem:[#allocation2 + $0x20] sm:$0xff] %v1504
    %1513 = vst [vmem:[#allocation2 + $0x38] sm:$0xff] %v1505
    %1514 = vst [vmem:[#allocation2 + $0x50] sm:$0xff] %v1506
    %1515 = vst [vmem:[#allocation2 + $0x68] sm:$0xff] %v1507
    %1516 = vst [vmem:[#allocation2 + $0x80] sm:$0xff] %v1508
    %1517 = vst [vmem:[#allocation2 + $0x98] sm:$0xff] %v1509
    %1518 = vst [vmem:[#allocation2 + $0xb0] sm:$0xff] %v1510
    %1519 = vmatprep.subr.mxu0 0.0
    %1520 = vmatpush1.msra.mxu0 %v1503
    %1521 = vmatprep.subr.mxu0 0.0
    %1522 = vmatpush1.msra.mxu0 %v1504
    %1523 = vmatprep.subr.mxu0 0.0
    %1524 = vmatpush1.msra.mxu0 0.0
    %1525 = vmatprep.subr.mxu0 0.0
    %1526 = vmatpush1.msra.mxu0 0.0
    %1527 = vmatprep.subr.mxu0 0.0
    %1528 = vmatpush1.msra.mxu0 0.0
    %1529 = vmatprep.subr.mxu0 0.0
    %1530 = vmatpush1.msra.mxu0 0.0
    %1531 = vmatprep.subr.mxu0 0.0
    %1532 = vmatpush1.msra.mxu0 0.0
    %1533 = vmatprep.subr.mxu0 0.0
    %1534 = vmatpush1.msra.mxu0 0.0
    %1535 = vmatprep.subr.mxu0 0.0
    %1536 = vmatpush1.msra.mxu0 0.0
    %1537 = vmatprep.subr.mxu0 0.0
    %1538 = vmatpush1.msra.mxu0 0.0
    %1539 = vmatprep.subr.mxu0 0.0
    %1540 = vmatpush1.msra.mxu0 0.0
    %1541 = vmatprep.subr.mxu0 0.0
    %1542 = vmatpush1.msra.mxu0 0.0
    %1543 = vmatprep.subr.mxu0 0.0
    %1544 = vmatpush1.msra.mxu0 0.0
    %1545 = vmatprep.subr.mxu0 0.0
    %1546 = vmatpush1.msra.mxu0 0.0
    %1547 = vmatprep.subr.mxu0 0.0
    %1548 = vmatpush1.msra.mxu0 0.0
    %1549 = vmatprep.subr.mxu0 0.0
    %1550 = vmatpush1.msra.mxu0 0.0
    %1551 = vmatprep.subr.mxu0 0.0
    %1552 = vmatpush1.msra.mxu0 0.0
    %1553 = vmatprep.subr.mxu0 0.0
    %1554 = vmatpush1.msra.mxu0 0.0
    %1555 = vmatprep.subr.mxu0 0.0
    %1556 = vmatpush1.msra.mxu0 0.0
    %1557 = vmatprep.subr.mxu0 0.0
    %1558 = vmatpush1.msra.mxu0 0.0
    %1559 = vmatprep.subr.mxu0 0.0
    %1560 = vmatpush1.msra.mxu0 0.0
    %1561 = vmatprep.subr.mxu0 0.0
    %1562 = vmatpush1.msra.mxu0 0.0
    %1563 = vmatprep.subr.mxu0 0.0
    %1564 = vmatpush1.msra.mxu0 0.0
    %1565 = vmatprep.subr.mxu0 0.0
    %1566 = vmatpush1.msra.mxu0 0.0
    %1567 = vmatprep.subr.mxu0 0.0
    %1568 = vmatpush1.msra.mxu0 0.0
    %1569 = vmatprep.subr.mxu0 0.0
    %1570 = vmatpush1.msra.mxu0 0.0
    %1571 = vmatprep.subr.mxu0 0.0
    %1572 = vmatpush1.msra.mxu0 0.0
    %1573 = vmatprep.subr.mxu0 0.0
    %1574 = vmatpush1.msra.mxu0 0.0
    %1575 = vmatprep.subr.mxu0 0.0
    %1576 = vmatpush1.msra.mxu0 0.0
    %1577 = vmatprep.subr.mxu0 0.0
    %1578 = vmatpush1.msra.mxu0 0.0
    %1579 = vmatprep.subr.mxu0 0.0
    %1580 = vmatpush1.msra.mxu0 0.0
    %1581 = vmatprep.subr.mxu0 0.0
    %1582 = vmatpush1.msra.mxu0 0.0
    %1583 = vmatprep.mubr.f32.mxu0 0.0
    %1584 = vmatmul.mubr.f32.gmra.mrb[0].mxu0 %v90
    %v1585 = vpop.f32.mrb[0].mxu0
    %v1586 = vadd.f32 0.0, %v1585
    %v1587 = vpop.f32.mrb[0].mxu0
    %1588 = vmatprep.mubr.f32.mxu0 0.0
    %1589 = vmatmul.mubr.f32.gmra.mrb[0].mxu0 %v93
    %v1590 = vpop.f32.mrb[0].mxu0
    %v1591 = vadd.f32 0.0, %v1590
    %v1592 = vpop.f32.mrb[0].mxu0
    %1593 = vdwg.mxu0
    %1594 = vmatprep.subr.mxu0 0.0
    %1595 = vmatpush1.msra.mxu0 %v1505
    %1596 = vmatprep.subr.mxu0 0.0
    %1597 = vmatpush1.msra.mxu0 %v1506
    %1598 = vmatprep.subr.mxu0 0.0
    %1599 = vmatpush1.msra.mxu0 0.0
    %1600 = vmatprep.subr.mxu0 0.0
    %1601 = vmatpush1.msra.mxu0 0.0
    %1602 = vmatprep.subr.mxu0 0.0
    %1603 = vmatpush1.msra.mxu0 0.0
    %1604 = vmatprep.subr.mxu0 0.0
    %1605 = vmatpush1.msra.mxu0 0.0
    %1606 = vmatprep.subr.mxu0 0.0
    %1607 = vmatpush1.msra.mxu0 0.0
    %1608 = vmatprep.subr.mxu0 0.0
    %1609 = vmatpush1.msra.mxu0 0.0
    %1610 = vmatprep.subr.mxu0 0.0
    %1611 = vmatpush1.msra.mxu0 0.0
    %1612 = vmatprep.subr.mxu0 0.0
    %1613 = vmatpush1.msra.mxu0 0.0
    %1614 = vmatprep.subr.mxu0 0.0
    %1615 = vmatpush1.msra.mxu0 0.0
    %1616 = vmatprep.subr.mxu0 0.0
    %1617 = vmatpush1.msra.mxu0 0.0
    %1618 = vmatprep.subr.mxu0 0.0
    %1619 = vmatpush1.msra.mxu0 0.0
    %1620 = vmatprep.subr.mxu0 0.0
    %1621 = vmatpush1.msra.mxu0 0.0
    %1622 = vmatprep.subr.mxu0 0.0
    %1623 = vmatpush1.msra.mxu0 0.0
    %1624 = vmatprep.subr.mxu0 0.0
    %1625 = vmatpush1.msra.mxu0 0.0
    %1626 = vmatprep.subr.mxu0 0.0
    %1627 = vmatpush1.msra.mxu0 0.0
    %1628 = vmatprep.subr.mxu0 0.0
    %1629 = vmatpush1.msra.mxu0 0.0
    %1630 = vmatprep.subr.mxu0 0.0
    %1631 = vmatpush1.msra.mxu0 0.0
    %1632 = vmatprep.subr.mxu0 0.0
    %1633 = vmatpush1.msra.mxu0 0.0
    %1634 = vmatprep.subr.mxu0 0.0
    %1635 = vmatpush1.msra.mxu0 0.0
    %1636 = vmatprep.subr.mxu0 0.0
    %1637 = vmatpush1.msra.mxu0 0.0
    %1638 = vmatprep.subr.mxu0 0.0
    %1639 = vmatpush1.msra.mxu0 0.0
    %1640 = vmatprep.subr.mxu0 0.0
    %1641 = vmatpush1.msra.mxu0 0.0
    %1642 = vmatprep.subr.mxu0 0.0
    %1643 = vmatpush1.msra.mxu0 0.0
    %1644 = vmatprep.subr.mxu0 0.0
    %1645 = vmatpush1.msra.mxu0 0.0
    %1646 = vmatprep.subr.mxu0 0.0
    %1647 = vmatpush1.msra.mxu0 0.0
    %1648 = vmatprep.subr.mxu0 0.0
    %1649 = vmatpush1.msra.mxu0 0.0
    %1650 = vmatprep.subr.mxu0 0.0
    %1651 = vmatpush1.msra.mxu0 0.0
    %1652 = vmatprep.subr.mxu0 0.0
    %1653 = vmatpush1.msra.mxu0 0.0
    %1654 = vmatprep.subr.mxu0 0.0
    %1655 = vmatpush1.msra.mxu0 0.0
    %1656 = vmatprep.subr.mxu0 0.0
    %1657 = vmatpush1.msra.mxu0 0.0
    %1658 = vmatprep.mubr.f32.mxu0 0.0
    %1659 = vmatmul.mubr.f32.gmra.mrb[0].mxu0 %v171
    %v1660 = vpop.f32.mrb[0].mxu0
    %v1661 = vadd.f32 0.0, %v1660
    %v1662 = vpop.f32.mrb[0].mxu0
    %1663 = vmatprep.mubr.f32.mxu0 0.0
    %1664 = vmatmul.mubr.f32.gmra.mrb[0].mxu0 %v174
    %v1665 = vpop.f32.mrb[0].mxu0
    %v1666 = vadd.f32 0.0, %v1665
    %v1667 = vpop.f32.mrb[0].mxu0
    %1668 = vdwg.mxu0
    %1669 = vmatprep.subr.mxu0 0.0
    %1670 = vmatpush1.msra.mxu0 %v1507
    %1671 = vmatprep.subr.mxu0 0.0
    %1672 = vmatpush1.msra.mxu0 %v1508
    %1673 = vmatprep.subr.mxu0 0.0
    %1674 = vmatpush1.msra.mxu0 0.0
    %1675 = vmatprep.subr.mxu0 0.0
    %1676 = vmatpush1.msra.mxu0 0.0
    %1677 = vmatprep.subr.mxu0 0.0
    %1678 = vmatpush1.msra.mxu0 0.0
    %1679 = vmatprep.subr.mxu0 0.0
    %1680 = vmatpush1.msra.mxu0 0.0
    %1681 = vmatprep.subr.mxu0 0.0
    %1682 = vmatpush1.msra.mxu0 0.0
    %1683 = vmatprep.subr.mxu0 0.0
    %1684 = vmatpush1.msra.mxu0 0.0
    %1685 = vmatprep.subr.mxu0 0.0
    %1686 = vmatpush1.msra.mxu0 0.0
    %1687 = vmatprep.subr.mxu0 0.0
    %1688 = vmatpush1.msra.mxu0 0.0
    %1689 = vmatprep.subr.mxu0 0.0
    %1690 = vmatpush1.msra.mxu0 0.0
    %1691 = vmatprep.subr.mxu0 0.0
    %1692 = vmatpush1.msra.mxu0 0.0
    %1693 = vmatprep.subr.mxu0 0.0
    %1694 = vmatpush1.msra.mxu0 0.0
    %1695 = vmatprep.subr.mxu0 0.0
    %1696 = vmatpush1.msra.mxu0 0.0
    %1697 = vmatprep.subr.mxu0 0.0
    %1698 = vmatpush1.msra.mxu0 0.0
    %1699 = vmatprep.subr.mxu0 0.0
    %1700 = vmatpush1.msra.mxu0 0.0
    %1701 = vmatprep.subr.mxu0 0.0
    %1702 = vmatpush1.msra.mxu0 0.0
    %1703 = vmatprep.subr.mxu0 0.0
    %1704 = vmatpush1.msra.mxu0 0.0
    %1705 = vmatprep.subr.mxu0 0.0
    %1706 = vmatpush1.msra.mxu0 0.0
    %1707 = vmatprep.subr.mxu0 0.0
    %1708 = vmatpush1.msra.mxu0 0.0
    %1709 = vmatprep.subr.mxu0 0.0
    %1710 = vmatpush1.msra.mxu0 0.0
    %1711 = vmatprep.subr.mxu0 0.0
    %1712 = vmatpush1.msra.mxu0 0.0
    %1713 = vmatprep.subr.mxu0 0.0
    %1714 = vmatpush1.msra.mxu0 0.0
    %1715 = vmatprep.subr.mxu0 0.0
    %1716 = vmatpush1.msra.mxu0 0.0
    %1717 = vmatprep.subr.mxu0 0.0
    %1718 = vmatpush1.msra.mxu0 0.0
    %1719 = vmatprep.subr.mxu0 0.0
    %1720 = vmatpush1.msra.mxu0 0.0
    %1721 = vmatprep.subr.mxu0 0.0
    %1722 = vmatpush1.msra.mxu0 0.0
    %1723 = vmatprep.subr.mxu0 0.0
    %1724 = vmatpush1.msra.mxu0 0.0
    %1725 = vmatprep.subr.mxu0 0.0
    %1726 = vmatpush1.msra.mxu0 0.0
    %1727 = vmatprep.subr.mxu0 0.0
    %1728 = vmatpush1.msra.mxu0 0.0
    %1729 = vmatprep.subr.mxu0 0.0
    %1730 = vmatpush1.msra.mxu0 0.0
    %1731 = vmatprep.subr.mxu0 0.0
    %1732 = vmatpush1.msra.mxu0 0.0
    %1733 = vmatprep.mubr.f32.mxu0 0.0
    %1734 = vmatmul.mubr.f32.gmra.mrb[0].mxu0 %v252
    %v1735 = vpop.f32.mrb[0].mxu0
    %v1736 = vadd.f32 0.0, %v1735
    %v1737 = vpop.f32.mrb[0].mxu0
    %1738 = vmatprep.mubr.f32.mxu0 0.0
    %1739 = vmatmul.mubr.f32.gmra.mrb[0].mxu0 %v255
    %v1740 = vpop.f32.mrb[0].mxu0
    %v1741 = vadd.f32 0.0, %v1740
    %v1742 = vpop.f32.mrb[0].mxu0
    %1743 = vdwg.mxu0
    %1744 = vmatprep.subr.mxu0 0.0
    %1745 = vmatpush1.msra.mxu0 %v1509
    %1746 = vmatprep.subr.mxu0 0.0
    %1747 = vmatpush1.msra.mxu0 %v1510
    %1748 = vmatprep.subr.mxu0 0.0
    %1749 = vmatpush1.msra.mxu0 0.0
    %1750 = vmatprep.subr.mxu0 0.0
    %1751 = vmatpush1.msra.mxu0 0.0
    %1752 = vmatprep.subr.mxu0 0.0
    %1753 = vmatpush1.msra.mxu0 0.0
    %1754 = vmatprep.subr.mxu0 0.0
    %1755 = vmatpush1.msra.mxu0 0.0
    %1756 = vmatprep.subr.mxu0 0.0
    %1757 = vmatpush1.msra.mxu0 0.0
    %1758 = vmatprep.subr.mxu0 0.0
    %1759 = vmatpush1.msra.mxu0 0.0
    %1760 = vmatprep.subr.mxu0 0.0
    %1761 = vmatpush1.msra.mxu0 0.0
    %1762 = vmatprep.subr.mxu0 0.0
    %1763 = vmatpush1.msra.mxu0 0.0
    %1764 = vmatprep.subr.mxu0 0.0
    %1765 = vmatpush1.msra.mxu0 0.0
    %1766 = vmatprep.subr.mxu0 0.0
    %1767 = vmatpush1.msra.mxu0 0.0
    %1768 = vmatprep.subr.mxu0 0.0
    %1769 = vmatpush1.msra.mxu0 0.0
    %1770 = vmatprep.subr.mxu0 0.0
    %1771 = vmatpush1.msra.mxu0 0.0
    %1772 = vmatprep.subr.mxu0 0.0
    %1773 = vmatpush1.msra.mxu0 0.0
    %1774 = vmatprep.subr.mxu0 0.0
    %1775 = vmatpush1.msra.mxu0 0.0
    %1776 = vmatprep.subr.mxu0 0.0
    %1777 = vmatpush1.msra.mxu0 0.0
    %1778 = vmatprep.subr.mxu0 0.0
    %1779 = vmatpush1.msra.mxu0 0.0
    %1780 = vmatprep.subr.mxu0 0.0
    %1781 = vmatpush1.msra.mxu0 0.0
    %1782 = vmatprep.subr.mxu0 0.0
    %1783 = vmatpush1.msra.mxu0 0.0
    %1784 = vmatprep.subr.mxu0 0.0
    %1785 = vmatpush1.msra.mxu0 0.0
    %1786 = vmatprep.subr.mxu0 0.0
    %1787 = vmatpush1.msra.mxu0 0.0
    %1788 = vmatprep.subr.mxu0 0.0
    %1789 = vmatpush1.msra.mxu0 0.0
    %1790 = vmatprep.subr.mxu0 0.0
    %1791 = vmatpush1.msra.mxu0 0.0
    %1792 = vmatprep.subr.mxu0 0.0
    %1793 = vmatpush1.msra.mxu0 0.0
    %1794 = vmatprep.subr.mxu0 0.0
    %1795 = vmatpush1.msra.mxu0 0.0
    %1796 = vmatprep.subr.mxu0 0.0
    %1797 = vmatpush1.msra.mxu0 0.0
    %1798 = vmatprep.subr.mxu0 0.0
    %1799 = vmatpush1.msra.mxu0 0.0
    %1800 = vmatprep.subr.mxu0 0.0
    %1801 = vmatpush1.msra.mxu0 0.0
    %1802 = vmatprep.subr.mxu0 0.0
    %1803 = vmatpush1.msra.mxu0 0.0
    %1804 = vmatprep.subr.mxu0 0.0
    %1805 = vmatpush1.msra.mxu0 0.0
    %1806 = vmatprep.subr.mxu0 0.0
    %1807 = vmatpush1.msra.mxu0 0.0
    %1808 = vmatprep.mubr.f32.mxu0 0.0
    %1809 = vmatmul.mubr.f32.gmra.mrb[0].mxu0 %v333
    %v1810 = vpop.f32.mrb[0].mxu0
    %v1811 = vadd.f32 0.0, %v1810
    %v1812 = vpop.f32.mrb[0].mxu0
    %1813 = vmatprep.mubr.f32.mxu0 0.0
    %1814 = vmatmul.mubr.f32.gmra.mrb[0].mxu0 %v336
    %v1815 = vpop.f32.mrb[0].mxu0
    %v1816 = vadd.f32 0.0, %v1815
    %v1817 = vpop.f32.mrb[0].mxu0
    %1818 = vdwg.mxu0
    %s1819 = scalar_lea.vmem [#allocation3], 256
    %v1820 = vld [vmem:[%s1819] sm:$0xff]
    %v1821 = vld [vmem:[%s1819 + $0x8] sm:$0xff]
    %v1822 = vld [vmem:[%s1819 + $0x10] sm:$0xff]
    %v1823 = vld [vmem:[%s1819 + $0x18] sm:$0xff]
    %v1824 = vld [vmem:[%s1819 + $0x20] sm:$0xff]
    %v1825 = vld [vmem:[%s1819 + $0x28] sm:$0xff]
    %v1826 = vld [vmem:[%s1819 + $0x30] sm:$0xff]
    %v1827 = vld [vmem:[%s1819 + $0x38] sm:$0xff]
    %v1828 = vld [vmem:[%s1819 + $0x40] sm:$0xff]
    %v1829 = vld [vmem:[%s1819 + $0x48] sm:$0xff]
    %v1830 = vld [vmem:[%s1819 + $0x50] sm:$0xff]
    %v1831 = vld [vmem:[%s1819 + $0x58] sm:$0xff]
    %v1832 = vld [vmem:[%s1819 + $0x60] sm:$0xff]
    %v1833 = vld [vmem:[%s1819 + $0x68] sm:$0xff]
    %v1834 = vld [vmem:[%s1819 + $0x70] sm:$0xff]
    %v1835 = vld [vmem:[%s1819 + $0x78] sm:$0xff]
    %s1836 = scalar_lea.vmem %s5, 2
    %v1837 = vld [vmem:[%s1836] sm:$0x1]
    %v1839 = vlaneseq
    %v1840 = vshrl.u32 %v1839, 7
    %v1841 = vsub.s32 0, %v1840
    %v1842 = vrot.slane %v1837, %v1841
    %1844 = vmatprep.subr.mxu0 0.0
    %1845 = vmatpush1.msra.mxu0 %v1820
    %1846 = vmatprep.subr.mxu0 0.0
    %1847 = vmatpush1.msra.mxu0 %v1821
    %1848 = vmatprep.subr.mxu0 0.0
    %1849 = vmatpush1.msra.mxu0 %v1822
    %1850 = vmatprep.subr.mxu0 0.0
    %1851 = vmatpush1.msra.mxu0 %v1823
    %1852 = vmatprep.subr.mxu0 0.0
    %1853 = vmatpush1.msra.mxu0 %v1824
    %1854 = vmatprep.subr.mxu0 0.0
    %1855 = vmatpush1.msra.mxu0 %v1825
    %1856 = vmatprep.subr.mxu0 0.0
    %1857 = vmatpush1.msra.mxu0 %v1826
    %1858 = vmatprep.subr.mxu0 0.0
    %1859 = vmatpush1.msra.mxu0 %v1827
    %1860 = vmatprep.subr.mxu0 0.0
    %1861 = vmatpush1.msra.mxu0 %v1828
    %1862 = vmatprep.subr.mxu0 0.0
    %1863 = vmatpush1.msra.mxu0 %v1829
    %1864 = vmatprep.subr.mxu0 0.0
    %1865 = vmatpush1.msra.mxu0 %v1830
    %1866 = vmatprep.subr.mxu0 0.0
    %1867 = vmatpush1.msra.mxu0 %v1831
    %1868 = vmatprep.subr.mxu0 0.0
    %1869 = vmatpush1.msra.mxu0 %v1832
    %1870 = vmatprep.subr.mxu0 0.0
    %1871 = vmatpush1.msra.mxu0 %v1833
    %1872 = vmatprep.subr.mxu0 0.0
    %1873 = vmatpush1.msra.mxu0 %v1834
    %1874 = vmatprep.subr.mxu0 0.0
    %1875 = vmatpush1.msra.mxu0 %v1835
    %1876 = vmatprep.subr.mxu0 0.0
    %1877 = vmatpush1.msra.mxu0 0.0
    %1878 = vmatprep.subr.mxu0 0.0
    %1879 = vmatpush1.msra.mxu0 0.0
    %1880 = vmatprep.subr.mxu0 0.0
    %1881 = vmatpush1.msra.mxu0 0.0
    %1882 = vmatprep.subr.mxu0 0.0
    %1883 = vmatpush1.msra.mxu0 0.0
    %1884 = vmatprep.subr.mxu0 0.0
    %1885 = vmatpush1.msra.mxu0 0.0
    %1886 = vmatprep.subr.mxu0 0.0
    %1887 = vmatpush1.msra.mxu0 0.0
    %1888 = vmatprep.subr.mxu0 0.0
    %1889 = vmatpush1.msra.mxu0 0.0
    %1890 = vmatprep.subr.mxu0 0.0
    %1891 = vmatpush1.msra.mxu0 0.0
    %1892 = vmatprep.subr.mxu0 0.0
    %1893 = vmatpush1.msra.mxu0 0.0
    %1894 = vmatprep.subr.mxu0 0.0
    %1895 = vmatpush1.msra.mxu0 0.0
    %1896 = vmatprep.subr.mxu0 0.0
    %1897 = vmatpush1.msra.mxu0 0.0
    %1898 = vmatprep.subr.mxu0 0.0
    %1899 = vmatpush1.msra.mxu0 0.0
    %1900 = vmatprep.subr.mxu0 0.0
    %1901 = vmatpush1.msra.mxu0 0.0
    %1902 = vmatprep.subr.mxu0 0.0
    %1903 = vmatpush1.msra.mxu0 0.0
    %1904 = vmatprep.subr.mxu0 0.0
    %1905 = vmatpush1.msra.mxu0 0.0
    %1906 = vmatprep.subr.mxu0 0.0
    %1907 = vmatpush1.msra.mxu0 0.0
    %1908 = vmatprep.mubr.f32.mxu0 0.0
    %1909 = vmatmul.mubr.f32.gmra.mrb[0].mxu0 %v1586
    %v1910 = vpop.f32.mrb[0].mxu0
    %v1911 = vadd.f32 %v1842, %v1910
    %v1912 = vpop.f32.mrb[0].mxu0
    %1913 = vmatprep.mubr.f32.mxu0 0.0
    %1914 = vmatmul.mubr.f32.gmra.mrb[0].mxu0 %v1591
    %v1915 = vpop.f32.mrb[0].mxu0
    %v1916 = vadd.f32 %v1842, %v1915
    %v1917 = vpop.f32.mrb[0].mxu0
    %1918 = vmatprep.mubr.f32.mxu0 0.0
    %1919 = vmatmul.mubr.f32.gmra.mrb[0].mxu0 %v1661
    %v1920 = vpop.f32.mrb[0].mxu0
    %v1921 = vadd.f32 %v1842, %v1920
    %v1922 = vpop.f32.mrb[0].mxu0
    %1923 = vmatprep.mubr.f32.mxu0 0.0
    %1924 = vmatmul.mubr.f32.gmra.mrb[0].mxu0 %v1666
    %v1925 = vpop.f32.mrb[0].mxu0
    %v1926 = vadd.f32 %v1842, %v1925
    %v1927 = vpop.f32.mrb[0].mxu0
    %1928 = vmatprep.mubr.f32.mxu0 0.0
    %1929 = vmatmul.mubr.f32.gmra.mrb[0].mxu0 %v1736
    %v1930 = vpop.f32.mrb[0].mxu0
    %v1931 = vadd.f32 %v1842, %v1930
    %v1932 = vpop.f32.mrb[0].mxu0
    %1933 = vmatprep.mubr.f32.mxu0 0.0
    %1934 = vmatmul.mubr.f32.gmra.mrb[0].mxu0 %v1741
    %v1935 = vpop.f32.mrb[0].mxu0
    %v1936 = vadd.f32 %v1842, %v1935
    %v1937 = vpop.f32.mrb[0].mxu0
    %1938 = vmatprep.mubr.f32.mxu0 0.0
    %1939 = vmatmul.mubr.f32.gmra.mrb[0].mxu0 %v1811
    %v1940 = vpop.f32.mrb[0].mxu0
    %v1941 = vadd.f32 %v1842, %v1940
    %v1942 = vpop.f32.mrb[0].mxu0
    %1943 = vmatprep.mubr.f32.mxu0 0.0
    %1944 = vmatmul.mubr.f32.gmra.mrb[0].mxu0 %v1816
    %v1945 = vpop.f32.mrb[0].mxu0
    %v1946 = vadd.f32 %v1842, %v1945
    %v1947 = vpop.f32.mrb[0].mxu0
    %1948 = vdwg.mxu0
    %v1949 = vmax.f32 %v1911, 0.0
    %v1950 = vmax.f32 %v1916, 0.0
    %v1951 = vmax.f32 %v1921, 0.0
    %v1952 = vmax.f32 %v1926, 0.0
    %v1953 = vmax.f32 %v1931, 0.0
    %v1954 = vmax.f32 %v1936, 0.0
    %v1955 = vmax.f32 %v1941, 0.0
    %v1956 = vmax.f32 %v1946, 0.0
    %s1957 = scalar_lea.vmem [#allocation6], 256
    %v1958 = vld [vmem:[%s1957] sm:$0xff]
    %v1959 = vld [vmem:[%s1957 + $0x8] sm:$0xff]
    %v1960 = vld [vmem:[%s1957 + $0x10] sm:$0xff]
    %v1961 = vld [vmem:[%s1957 + $0x18] sm:$0xff]
    %v1962 = vld [vmem:[%s1957 + $0x20] sm:$0xff]
    %v1963 = vld [vmem:[%s1957 + $0x28] sm:$0xff]
    %v1964 = vld [vmem:[%s1957 + $0x30] sm:$0xff]
    %v1965 = vld [vmem:[%s1957 + $0x38] sm:$0xff]
    %v1966 = vld [vmem:[%s1957 + $0x40] sm:$0xff]
    %v1967 = vld [vmem:[%s1957 + $0x48] sm:$0xff]
    %v1968 = vld [vmem:[%s1957 + $0x50] sm:$0xff]
    %v1969 = vld [vmem:[%s1957 + $0x58] sm:$0xff]
    %v1970 = vld [vmem:[%s1957 + $0x60] sm:$0xff]
    %v1971 = vld [vmem:[%s1957 + $0x68] sm:$0xff]
    %v1972 = vld [vmem:[%s1957 + $0x70] sm:$0xff]
    %v1973 = vld [vmem:[%s1957 + $0x78] sm:$0xff]
    %s1974 = scalar_lea.vmem %s7, 2
    %v1975 = vld [vmem:[%s1974] sm:$0x1]
    %v1977 = vlaneseq
    %v1978 = vshrl.u32 %v1977, 7
    %v1979 = vsub.s32 0, %v1978
    %v1980 = vrot.slane %v1975, %v1979
    %1982 = vmatprep.subr.mxu0 0.0
    %1983 = vmatpush1.msra.mxu0 %v1958
    %1984 = vmatprep.subr.mxu0 0.0
    %1985 = vmatpush1.msra.mxu0 %v1959
    %1986 = vmatprep.subr.mxu0 0.0
    %1987 = vmatpush1.msra.mxu0 %v1960
    %1988 = vmatprep.subr.mxu0 0.0
    %1989 = vmatpush1.msra.mxu0 %v1961
    %1990 = vmatprep.subr.mxu0 0.0
    %1991 = vmatpush1.msra.mxu0 %v1962
    %1992 = vmatprep.subr.mxu0 0.0
    %1993 = vmatpush1.msra.mxu0 %v1963
    %1994 = vmatprep.subr.mxu0 0.0
    %1995 = vmatpush1.msra.mxu0 %v1964
    %1996 = vmatprep.subr.mxu0 0.0
    %1997 = vmatpush1.msra.mxu0 %v1965
    %1998 = vmatprep.subr.mxu0 0.0
    %1999 = vmatpush1.msra.mxu0 %v1966
    %2000 = vmatprep.subr.mxu0 0.0
    %2001 = vmatpush1.msra.mxu0 %v1967
    %2002 = vmatprep.subr.mxu0 0.0
    %2003 = vmatpush1.msra.mxu0 %v1968
    %2004 = vmatprep.subr.mxu0 0.0
    %2005 = vmatpush1.msra.mxu0 %v1969
    %2006 = vmatprep.subr.mxu0 0.0
    %2007 = vmatpush1.msra.mxu0 %v1970
    %2008 = vmatprep.subr.mxu0 0.0
    %2009 = vmatpush1.msra.mxu0 %v1971
    %2010 = vmatprep.subr.mxu0 0.0
    %2011 = vmatpush1.msra.mxu0 %v1972
    %2012 = vmatprep.subr.mxu0 0.0
    %2013 = vmatpush1.msra.mxu0 %v1973
    %2014 = vmatprep.subr.mxu0 0.0
    %2015 = vmatpush1.msra.mxu0 0.0
    %2016 = vmatprep.subr.mxu0 0.0
    %2017 = vmatpush1.msra.mxu0 0.0
    %2018 = vmatprep.subr.mxu0 0.0
    %2019 = vmatpush1.msra.mxu0 0.0
    %2020 = vmatprep.subr.mxu0 0.0
    %2021 = vmatpush1.msra.mxu0 0.0
    %2022 = vmatprep.subr.mxu0 0.0
    %2023 = vmatpush1.msra.mxu0 0.0
    %2024 = vmatprep.subr.mxu0 0.0
    %2025 = vmatpush1.msra.mxu0 0.0
    %2026 = vmatprep.subr.mxu0 0.0
    %2027 = vmatpush1.msra.mxu0 0.0
    %2028 = vmatprep.subr.mxu0 0.0
    %2029 = vmatpush1.msra.mxu0 0.0
    %2030 = vmatprep.subr.mxu0 0.0
    %2031 = vmatpush1.msra.mxu0 0.0
    %2032 = vmatprep.subr.mxu0 0.0
    %2033 = vmatpush1.msra.mxu0 0.0
    %2034 = vmatprep.subr.mxu0 0.0
    %2035 = vmatpush1.msra.mxu0 0.0
    %2036 = vmatprep.subr.mxu0 0.0
    %2037 = vmatpush1.msra.mxu0 0.0
    %2038 = vmatprep.subr.mxu0 0.0
    %2039 = vmatpush1.msra.mxu0 0.0
    %2040 = vmatprep.subr.mxu0 0.0
    %2041 = vmatpush1.msra.mxu0 0.0
    %2042 = vmatprep.subr.mxu0 0.0
    %2043 = vmatpush1.msra.mxu0 0.0
    %2044 = vmatprep.subr.mxu0 0.0
    %2045 = vmatpush1.msra.mxu0 0.0
    %2046 = vmatprep.mubr.f32.mxu0 0.0
    %2047 = vmatmul.mubr.f32.gmra.mrb[0].mxu0 %v1949
    %v2048 = vpop.f32.mrb[0].mxu0
    %v2049 = vadd.f32 %v1980, %v2048
    %v2050 = vpop.f32.mrb[0].mxu0
    %2051 = vmatprep.mubr.f32.mxu0 0.0
    %2052 = vmatmul.mubr.f32.gmra.mrb[0].mxu0 %v1950
    %v2053 = vpop.f32.mrb[0].mxu0
    %v2054 = vadd.f32 %v1980, %v2053
    %v2055 = vpop.f32.mrb[0].mxu0
    %2056 = vmatprep.mubr.f32.mxu0 0.0
    %2057 = vmatmul.mubr.f32.gmra.mrb[0].mxu0 %v1951
    %v2058 = vpop.f32.mrb[0].mxu0
    %v2059 = vadd.f32 %v1980, %v2058
    %v2060 = vpop.f32.mrb[0].mxu0
    %2061 = vmatprep.mubr.f32.mxu0 0.0
    %2062 = vmatmul.mubr.f32.gmra.mrb[0].mxu0 %v1952
    %v2063 = vpop.f32.mrb[0].mxu0
    %v2064 = vadd.f32 %v1980, %v2063
    %v2065 = vpop.f32.mrb[0].mxu0
    %2066 = vmatprep.mubr.f32.mxu0 0.0
    %2067 = vmatmul.mubr.f32.gmra.mrb[0].mxu0 %v1953
    %v2068 = vpop.f32.mrb[0].mxu0
    %v2069 = vadd.f32 %v1980, %v2068
    %v2070 = vpop.f32.mrb[0].mxu0
    %2071 = vmatprep.mubr.f32.mxu0 0.0
    %2072 = vmatmul.mubr.f32.gmra.mrb[0].mxu0 %v1954
    %v2073 = vpop.f32.mrb[0].mxu0
    %v2074 = vadd.f32 %v1980, %v2073
    %v2075 = vpop.f32.mrb[0].mxu0
    %2076 = vmatprep.mubr.f32.mxu0 0.0
    %2077 = vmatmul.mubr.f32.gmra.mrb[0].mxu0 %v1955
    %v2078 = vpop.f32.mrb[0].mxu0
    %v2079 = vadd.f32 %v1980, %v2078
    %v2080 = vpop.f32.mrb[0].mxu0
    %2081 = vmatprep.mubr.f32.mxu0 0.0
    %2082 = vmatmul.mubr.f32.gmra.mrb[0].mxu0 %v1956
    %v2083 = vpop.f32.mrb[0].mxu0
    %v2084 = vadd.f32 %v1980, %v2083
    %v2085 = vpop.f32.mrb[0].mxu0
    %2086 = vdwg.mxu0
    %v2087 = vmax.f32 %v2049, 0.0
    %v2088 = vmax.f32 %v2054, 0.0
    %v2089 = vmax.f32 %v2059, 0.0
    %v2090 = vmax.f32 %v2064, 0.0
    %v2091 = vmax.f32 %v2069, 0.0
    %v2092 = vmax.f32 %v2074, 0.0
    %v2093 = vmax.f32 %v2079, 0.0
    %v2094 = vmax.f32 %v2084, 0.0
    %v2095 = vmul.f32 %v2087, %v688
    %v2096 = vmul.f32 %v2088, %v693
    %v2097 = vmul.f32 %v2089, %v698
    %v2098 = vmul.f32 %v2090, %v703
    %v2099 = vmul.f32 %v2091, %v708
    %v2100 = vmul.f32 %v2092, %v713
    %v2101 = vmul.f32 %v2093, %v718
    %v2102 = vmul.f32 %v2094, %v723
    %v2103 = vadd.f32 %v2095, %v2096
    %v2104 = vadd.f32 %v2103, %v2097
    %v2105 = vadd.f32 %v2104, %v2098
    %v2106 = vadd.f32 %v2105, %v2099
    %v2107 = vadd.f32 %v2106, %v2100
    %v2108 = vadd.f32 %v2107, %v2101
    %v2109 = vadd.f32 %v2108, %v2102
    %v2110 = vrot.slane %v2109, 4
    %v2111 = vadd.f32 %v2109, %v2110
    %v2112 = vrot.slane %v2111, 2
    %v2113 = vadd.f32 %v2111, %v2112
    %v2114 = vrot.slane %v2113, 1
    %v2115 = vadd.f32 %v2113, %v2114
    %v2116 = vmul.f32 %v2115, 0.018518519
    %v2117 = vsub.f32 %v2087, %v2116
    %v2118 = vsub.f32 %v2088, %v2116
    %v2119 = vsub.f32 %v2089, %v2116
    %v2120 = vsub.f32 %v2090, %v2116
    %v2121 = vsub.f32 %v2091, %v2116
    %v2122 = vsub.f32 %v2092, %v2116
    %v2123 = vsub.f32 %v2093, %v2116
    %v2124 = vsub.f32 %v2094, %v2116
    %v2125 = vmul.f32 %v2117, %v688
    %v2126 = vmul.f32 %v2118, %v693
    %v2127 = vmul.f32 %v2119, %v698
    %v2128 = vmul.f32 %v2120, %v703
    %v2129 = vmul.f32 %v2121, %v708
    %v2130 = vmul.f32 %v2122, %v713
    %v2131 = vmul.f32 %v2123, %v718
    %v2132 = vmul.f32 %v2124, %v723
    %v2133 = vmul.f32 %v2125, %v2125
    %v2134 = vmul.f32 %v2126, %v2126
    %v2135 = vmul.f32 %v2127, %v2127
    %v2136 = vmul.f32 %v2128, %v2128
    %v2137 = vmul.f32 %v2129, %v2129
    %v2138 = vmul.f32 %v2130, %v2130
    %v2139 = vmul.f32 %v2131, %v2131
    %v2140 = vmul.f32 %v2132, %v2132
    %v2141 = vadd.f32 %v2133, %v2134
    %v2142 = vadd.f32 %v2141, %v2135
    %v2143 = vadd.f32 %v2142, %v2136
    %v2144 = vadd.f32 %v2143, %v2137
    %v2145 = vadd.f32 %v2144, %v2138
    %v2146 = vadd.f32 %v2145, %v2139
    %v2147 = vadd.f32 %v2146, %v2140
    %v2148 = vrot.slane %v2147, 4
    %v2149 = vadd.f32 %v2147, %v2148
    %v2150 = vrot.slane %v2149, 2
    %v2151 = vadd.f32 %v2149, %v2150
    %v2152 = vrot.slane %v2151, 1
    %v2153 = vadd.f32 %v2151, %v2152
    %v2154 = vmul.f32 %v2153, 0.018518519
    %s2155 = scalar_lea.vmem %s8, 2
    %v2156 = vld [vmem:[%s2155] sm:$0x1]
    %v2158 = vlaneseq
    %v2159 = vshrl.u32 %v2158, 7
    %v2160 = vsub.s32 0, %v2159
    %v2161 = vrot.slane %v2156, %v2160
    %v2163 = vmul.f32 %v2161, %v2117
    %v2164 = vmul.f32 %v2161, %v2118
    %v2165 = vmul.f32 %v2161, %v2119
    %v2166 = vmul.f32 %v2161, %v2120
    %v2167 = vmul.f32 %v2161, %v2121
    %v2168 = vmul.f32 %v2161, %v2122
    %v2169 = vmul.f32 %v2161, %v2123
    %v2170 = vmul.f32 %v2161, %v2124
    %v2171 = vadd.f32 %v2154, 1e-05
    %v2172 = vrsqrt.pop %v2171
    %v2173 = vmul.f32 %v2163, %v2172
    %v2174 = vmul.f32 %v2164, %v2172
    %v2175 = vmul.f32 %v2165, %v2172
    %v2176 = vmul.f32 %v2166, %v2172
    %v2177 = vmul.f32 %v2167, %v2172
    %v2178 = vmul.f32 %v2168, %v2172
    %v2179 = vmul.f32 %v2169, %v2172
    %v2180 = vmul.f32 %v2170, %v2172
    %s2181 = scalar_lea.vmem %s9, 2
    %v2182 = vld [vmem:[%s2181] sm:$0x1]
    %v2184 = vlaneseq
    %v2185 = vshrl.u32 %v2184, 7
    %v2186 = vsub.s32 0, %v2185
    %v2187 = vrot.slane %v2182, %v2186
    %v2189 = vadd.f32 %v2173, %v2187
    %v2190 = vadd.f32 %v2174, %v2187
    %v2191 = vadd.f32 %v2175, %v2187
    %v2192 = vadd.f32 %v2176, %v2187
    %v2193 = vadd.f32 %v2177, %v2187
    %v2194 = vadd.f32 %v2178, %v2187
    %v2195 = vadd.f32 %v2179, %v2187
    %v2196 = vadd.f32 %v2180, %v2187
    %2197 = vst [vmem:[#allocation2 + $0x10] sm:$0xff] %v2189
    %2198 = vst [vmem:[#allocation2 + $0x28] sm:$0xff] %v2190
    %2199 = vst [vmem:[#allocation2 + $0x40] sm:$0xff] %v2191
    %2200 = vst [vmem:[#allocation2 + $0x58] sm:$0xff] %v2192
    %2201 = vst [vmem:[#allocation2 + $0x70] sm:$0xff] %v2193
    %2202 = vst [vmem:[#allocation2 + $0x88] sm:$0xff] %v2194
    %2203 = vst [vmem:[#allocation2 + $0xa0] sm:$0xff] %v2195
    %2204 = vst [vmem:[#allocation2 + $0xb8] sm:$0xff] %v2196
    %v2205 = vld [vmem:[#allocation2] sm:$0xff]
    %v2206 = vld [vmem:[#allocation2 + $0x8] sm:$0xff]
    %v2207 = vld [vmem:[#allocation2 + $0x10] sm:$0xff]
    %v2208 = vld [vmem:[#allocation2 + $0x18] sm:$0xff]
    %v2209 = vld [vmem:[#allocation2 + $0x20] sm:$0xff]
    %v2210 = vld [vmem:[#allocation2 + $0x28] sm:$0xff]
    %v2211 = vld [vmem:[#allocation2 + $0x30] sm:$0xff]
    %v2212 = vld [vmem:[#allocation2 + $0x38] sm:$0xff]
    %v2213 = vld [vmem:[#allocation2 + $0x40] sm:$0xff]
    %v2214 = vld [vmem:[#allocation2 + $0x48] sm:$0xff]
    %v2215 = vld [vmem:[#allocation2 + $0x50] sm:$0xff]
    %v2216 = vld [vmem:[#allocation2 + $0x58] sm:$0xff]
    %v2217 = vld [vmem:[#allocation2 + $0x60] sm:$0xff]
    %v2218 = vld [vmem:[#allocation2 + $0x68] sm:$0xff]
    %v2219 = vld [vmem:[#allocation2 + $0x70] sm:$0xff]
    %v2220 = vld [vmem:[#allocation2 + $0x78] sm:$0xff]
    %v2221 = vld [vmem:[#allocation2 + $0x80] sm:$0xff]
    %v2222 = vld [vmem:[#allocation2 + $0x88] sm:$0xff]
    %v2223 = vld [vmem:[#allocation2 + $0x90] sm:$0xff]
    %v2224 = vld [vmem:[#allocation2 + $0x98] sm:$0xff]
    %v2225 = vld [vmem:[#allocation2 + $0xa0] sm:$0xff]
    %v2226 = vld [vmem:[#allocation2 + $0xa8] sm:$0xff]
    %v2227 = vld [vmem:[#allocation2 + $0xb0] sm:$0xff]
    %v2228 = vld [vmem:[#allocation2 + $0xb8] sm:$0xff]
    %v2229 = vld [vmem:[%s3] sm:$0xff]
    %v2230 = vld [vmem:[%s3 + $0x8] sm:$0xff]
    %v2231 = vld [vmem:[%s3 + $0x10] sm:$0xff]
    %v2232 = vld [vmem:[%s3 + $0x18] sm:$0xff]
    %v2233 = vld [vmem:[%s3 + $0x20] sm:$0xff]
    %v2234 = vld [vmem:[%s3 + $0x28] sm:$0xff]
    %v2235 = vld [vmem:[%s3 + $0x30] sm:$0xff]
    %v2236 = vld [vmem:[%s3 + $0x38] sm:$0xff]
    %vm2237 = vcmp.gt.f32.partialorder %v2229, 0.5
    %vm2238 = vcmp.gt.f32.partialorder %v2230, 0.5
    %vm2239 = vcmp.gt.f32.partialorder %v2231, 0.5
    %vm2240 = vcmp.gt.f32.partialorder %v2232, 0.5
    %vm2241 = vcmp.gt.f32.partialorder %v2233, 0.5
    %vm2242 = vcmp.gt.f32.partialorder %v2234, 0.5
    %vm2243 = vcmp.gt.f32.partialorder %v2235, 0.5
    %vm2244 = vcmp.gt.f32.partialorder %v2236, 0.5
    %v2245 = vsel %vm2237, 1, 0
    %v2246 = vsel %vm2238, 1, 0
    %v2247 = vsel %vm2239, 1, 0
    %v2248 = vsel %vm2240, 1, 0
    %v2249 = vsel %vm2241, 1, 0
    %v2250 = vsel %vm2242, 1, 0
    %v2251 = vsel %vm2243, 1, 0
    %v2252 = vsel %vm2244, 1, 0
    %2253 = vset.pattern.permute.xlu0 0
    %2254 = vperm.xlu0 %2253, %v2245
    %v2255 = vpop.permute.xlu0 %2254
    %2256 = vset.pattern.permute.xlu0 0
    %2257 = vperm.xlu0 %2256, %v2246
    %v2258 = vpop.permute.xlu0 %2257
    %2259 = vset.pattern.permute.xlu0 0
    %2260 = vperm.xlu0 %2259, %v2247
    %v2261 = vpop.permute.xlu0 %2260
    %2262 = vset.pattern.permute.xlu0 0
    %2263 = vperm.xlu0 %2262, %v2248
    %v2264 = vpop.permute.xlu0 %2263
    %2265 = vset.pattern.permute.xlu0 0
    %2266 = vperm.xlu0 %2265, %v2249
    %v2267 = vpop.permute.xlu0 %2266
    %2268 = vset.pattern.permute.xlu0 0
    %2269 = vperm.xlu0 %2268, %v2250
    %v2270 = vpop.permute.xlu0 %2269
    %2271 = vset.pattern.permute.xlu0 0
    %2272 = vperm.xlu0 %2271, %v2251
    %v2273 = vpop.permute.xlu0 %2272
    %2274 = vset.pattern.permute.xlu0 0
    %2275 = vperm.xlu0 %2274, %v2252
    %v2276 = vpop.permute.xlu0 %2275
    %vm2277 = vcmp.eq.s32.totalorder %v2255, 1
    %vm2278 = vcmp.eq.s32.totalorder %v2258, 1
    %vm2279 = vcmp.eq.s32.totalorder %v2261, 1
    %vm2280 = vcmp.eq.s32.totalorder %v2264, 1
    %vm2281 = vcmp.eq.s32.totalorder %v2267, 1
    %vm2282 = vcmp.eq.s32.totalorder %v2270, 1
    %vm2283 = vcmp.eq.s32.totalorder %v2273, 1
    %vm2284 = vcmp.eq.s32.totalorder %v2276, 1
    %v2285 = vsel %vm2277, %v2205, -inf
    %v2286 = vsel %vm2277, %v2206, -inf
    %v2287 = vsel %vm2277, %v2207, -inf
    %v2288 = vsel %vm2278, %v2208, -inf
    %v2289 = vsel %vm2278, %v2209, -inf
    %v2290 = vsel %vm2278, %v2210, -inf
    %v2291 = vsel %vm2279, %v2211, -inf
    %v2292 = vsel %vm2279, %v2212, -inf
    %v2293 = vsel %vm2279, %v2213, -inf
    %v2294 = vsel %vm2280, %v2214, -inf
    %v2295 = vsel %vm2280, %v2215, -inf
    %v2296 = vsel %vm2280, %v2216, -inf
    %v2297 = vsel %vm2281, %v2217, -inf
    %v2298 = vsel %vm2281, %v2218, -inf
    %v2299 = vsel %vm2281, %v2219, -inf
    %v2300 = vsel %vm2282, %v2220, -inf
    %v2301 = vsel %vm2282, %v2221, -inf
    %v2302 = vsel %vm2282, %v2222, -inf
    %v2303 = vsel %vm2283, %v2223, -inf
    %v2304 = vsel %vm2283, %v2224, -inf
    %v2305 = vsel %vm2283, %v2225, -inf
    %v2306 = vsel %vm2284, %v2226, -inf
    %v2307 = vsel %vm2284, %v2227, -inf
    %v2308 = vsel %vm2284, %v2228, -inf
    %v2309 = vmax.f32 %v2285, %v2288
    %v2310 = vrot.slane %v2309, 4
    %v2311 = vmax.f32 %v2309, %v2310
    %v2312 = vrot.slane %v2311, 2
    %v2313 = vmax.f32 %v2311, %v2312
    %v2314 = vrot.slane %v2313, 1
    %v2315 = vmax.f32 %v2313, %v2314
    %v2316 = vmax.f32 %v2286, %v2289
    %v2317 = vrot.slane %v2316, 4
    %v2318 = vmax.f32 %v2316, %v2317
    %v2319 = vrot.slane %v2318, 2
    %v2320 = vmax.f32 %v2318, %v2319
    %v2321 = vrot.slane %v2320, 1
    %v2322 = vmax.f32 %v2320, %v2321
    %v2323 = vmax.f32 %v2287, %v2290
    %v2324 = vrot.slane %v2323, 4
    %v2325 = vmax.f32 %v2323, %v2324
    %v2326 = vrot.slane %v2325, 2
    %v2327 = vmax.f32 %v2325, %v2326
    %v2328 = vrot.slane %v2327, 1
    %v2329 = vmax.f32 %v2327, %v2328
    %v2330 = vmax.f32 %v2291, %v2294
    %v2331 = vrot.slane %v2330, 4
    %v2332 = vmax.f32 %v2330, %v2331
    %v2333 = vrot.slane %v2332, 2
    %v2334 = vmax.f32 %v2332, %v2333
    %v2335 = vrot.slane %v2334, 1
    %v2336 = vmax.f32 %v2334, %v2335
    %v2337 = vmax.f32 %v2292, %v2295
    %v2338 = vrot.slane %v2337, 4
    %v2339 = vmax.f32 %v2337, %v2338
    %v2340 = vrot.slane %v2339, 2
    %v2341 = vmax.f32 %v2339, %v2340
    %v2342 = vrot.slane %v2341, 1
    %v2343 = vmax.f32 %v2341, %v2342
    %v2344 = vmax.f32 %v2293, %v2296
    %v2345 = vrot.slane %v2344, 4
    %v2346 = vmax.f32 %v2344, %v2345
    %v2347 = vrot.slane %v2346, 2
    %v2348 = vmax.f32 %v2346, %v2347
    %v2349 = vrot.slane %v2348, 1
    %v2350 = vmax.f32 %v2348, %v2349
    %v2351 = vmax.f32 %v2297, %v2300
    %v2352 = vrot.slane %v2351, 4
    %v2353 = vmax.f32 %v2351, %v2352
    %v2354 = vrot.slane %v2353, 2
    %v2355 = vmax.f32 %v2353, %v2354
    %v2356 = vrot.slane %v2355, 1
    %v2357 = vmax.f32 %v2355, %v2356
    %v2358 = vmax.f32 %v2298, %v2301
    %v2359 = vrot.slane %v2358, 4
    %v2360 = vmax.f32 %v2358, %v2359
    %v2361 = vrot.slane %v2360, 2
    %v2362 = vmax.f32 %v2360, %v2361
    %v2363 = vrot.slane %v2362, 1
    %v2364 = vmax.f32 %v2362, %v2363
    %v2365 = vmax.f32 %v2299, %v2302
    %v2366 = vrot.slane %v2365, 4
    %v2367 = vmax.f32 %v2365, %v2366
    %v2368 = vrot.slane %v2367, 2
    %v2369 = vmax.f32 %v2367, %v2368
    %v2370 = vrot.slane %v2369, 1
    %v2371 = vmax.f32 %v2369, %v2370
    %v2372 = vmax.f32 %v2303, %v2306
    %v2373 = vrot.slane %v2372, 4
    %v2374 = vmax.f32 %v2372, %v2373
    %v2375 = vrot.slane %v2374, 2
    %v2376 = vmax.f32 %v2374, %v2375
    %v2377 = vrot.slane %v2376, 1
    %v2378 = vmax.f32 %v2376, %v2377
    %v2379 = vmax.f32 %v2304, %v2307
    %v2380 = vrot.slane %v2379, 4
    %v2381 = vmax.f32 %v2379, %v2380
    %v2382 = vrot.slane %v2381, 2
    %v2383 = vmax.f32 %v2381, %v2382
    %v2384 = vrot.slane %v2383, 1
    %v2385 = vmax.f32 %v2383, %v2384
    %v2386 = vmax.f32 %v2305, %v2308
    %v2387 = vrot.slane %v2386, 4
    %v2388 = vmax.f32 %v2386, %v2387
    %v2389 = vrot.slane %v2388, 2
    %v2390 = vmax.f32 %v2388, %v2389
    %v2391 = vrot.slane %v2390, 1
    %v2392 = vmax.f32 %v2390, %v2391
    %v2405 = vcombine.low %v2315, %v2322
    %v2406 = vcombine.low %v2336, %v2343
    %v2407 = vcombine.low %v2357, %v2364
    %v2408 = vcombine.low %v2378, %v2385
    %v2409 = vrot.slane %v2406, 7
    %vm2410 = vcmask 1041409
    %v2411 = vsel %vm2410, %v2409, %v2405
    %vm2412 = vcmask 1045509
    %v2413 = vsel %vm2412, %v2409, %v2411
    %v2414 = vrot.slane %v2407, 6
    %vm2415 = vcmask 1042434
    %v2416 = vsel %vm2415, %v2414, %v2413
    %vm2417 = vcmask 1046534
    %v2418 = vsel %vm2417, %v2414, %v2416
    %v2419 = vrot.slane %v2408, 5
    %vm2420 = vcmask 1043459
    %v2421 = vsel %vm2420, %v2419, %v2418
    %vm2422 = vcmask 1047559
    %v2423 = vsel %vm2422, %v2419, %v2421
    %v2424 = vrot.slane %v2350, 7
    %v2425 = vsel %vm2410, %v2424, %v2329
    %v2426 = vsel %vm2412, %v2424, %v2425
    %v2427 = vrot.slane %v2371, 6
    %v2428 = vsel %vm2415, %v2427, %v2426
    %v2429 = vsel %vm2417, %v2427, %v2428
    %v2430 = vrot.slane %v2392, 5
    %v2431 = vsel %vm2420, %v2430, %v2429
    %v2432 = vsel %vm2422, %v2430, %v2431
    %2435 = vst [vmem:[#allocation8] sm:$0xff] %v2423
    %2436 = vst [vmem:[#allocation8 + $0x8] sm:$0xf] %v2432
    // Predicated region
    $region50: #{tpu_custom_call.1} parent=1 // pred_check
      _
    $region51: #{tpu_custom_call.1} parent=1 // pred_check_branch
      %2438 = sbr.rel (0) target = $region53
    $region52: #{tpu_custom_call.1} parent=1 // pred_region
      %s2440 = ssub.s32 192, 192
      %2441 = vsyncadd [#allocation5], %s2440
      %s2443 = sshll.u32 [#allocation8], 4
      %s2444 = int_to_ptr.vmem [resolvable:$true] %s2443
      %2446 = dma.vmem_to_hbm [thread:$0]  %s2444, 192, %s10, [#allocation5]
    $region53: #{tpu_custom_call.1} parent=1 // pred_fallthru
      _
    // Predicated region
    $region54: #{tpu_custom_call.1} parent=1 // pred_check
      _
    $region55: #{tpu_custom_call.1} parent=1 // pred_check_branch
      %2448 = sbr.rel (0) target = $region57
    $region56: #{tpu_custom_call.1} parent=1 // pred_region
      %2449 = dma.done [#allocation5], 192
    $region57: #{tpu_custom_call.1} parent=1 // pred_fallthru
      _
    %2450 = vsyncpa [#allocation4], 1
    %2451 = vsyncpa [#allocation7], 1
    %2452 = vsyncpa [#allocation5], 1

</llo_original>
